<compile_context>
chip_gen: v5e
topology: v5e:2x2
jax: 0.10.0
libtpu: 0.0.40
codegen_flags: <defaults>
</compile_context>

<pallas_src>
import math
from functools import partial

import jax
import jax.numpy as jnp
from jax import lax
from jax.experimental import pallas as pl
from jax.experimental.pallas import tpu as pltpu

BN_EPS = 1e-5


# ----------------------------------------------------------------------------
# Pallas kernel
# ----------------------------------------------------------------------------
def _make_kernel(B, H, W, Cin, Chid, Cout, stride, use_res):
    Ho = (H - 1) // stride + 1          # 3x3 conv, pad=1
    Wo = (W - 1) // stride + 1
    BH, WC = B * H, W * Chid
    WCin, WoC = W * Cin, Wo * Cout

    def kernel(x_ref, w1_ref, b1_ref, wdw_ref, b2_ref, w3_ref, b3_ref, *rest):
        if stride == 2:
            sel_ref, o_ref = rest
        else:
            (o_ref,) = rest

        # ---- 1) 1x1 expand conv (+ folded BN) + ReLU6 on the MXU ------------
        # Block-diagonal weight keeps the result lane-dense row-major:
        # (B*H, W*Cin) @ (W*Cin, W*Chid) -> (B*H, W*Chid), no relayout.
        hrow = jnp.dot(x_ref[...].reshape(BH, WCin), w1_ref[...],
                       preferred_element_type=jnp.float32)
        hrow = jnp.clip(hrow + b1_ref[...], 0.0, 6.0)

        # ---- 2) 3x3 depthwise conv (+ folded BN) + ReLU6, in registers ------
        col = lax.broadcasted_iota(jnp.int32, (1, WC), 1)      # fused W*Chid lane
        row = lax.broadcasted_iota(jnp.int32, (BH, 1), 0)      # fused B*H rows

        def row_ok(sh):
            # Rows for which the vertical tap `sh` stays inside its own image
            # (also masks cross-image contamination from the fused-batch roll).
            if sh > 0:
                bad = row == (H - 1)
                for b in range(1, B):
                    bad = jnp.logical_or(bad, row == (b * H + H - 1))
            else:
                bad = row == 0
                for b in range(1, B):
                    bad = jnp.logical_or(bad, row == b * H)
            return jnp.logical_not(bad)

        acc = jnp.zeros((BH, WC), jnp.float32)
        # 9-tap loop unrolled at trace time; dh outer so only one sublane-rolled
        # copy is live at a time (small vreg working set).
        for dh in range(3):
            sh = dh - 1
            if sh == 0:
                base = hrow
            else:
                base = pltpu.roll(hrow, (-sh) % BH, axis=0)        # sublane roll
                base = jnp.where(row_ok(sh), base, 0.0)
            for dw in range(3):
                sw = dw - 1
                if sw == 0:
                    a = base
                else:
                    a = pltpu.roll(base, (-sw * Chid) % WC, axis=1)  # lane roll
                    ok = (col < (W - 1) * Chid) if sw > 0 else (col >= Chid)
                    a = jnp.where(ok, a, 0.0)
                t = dh * 3 + dw
                acc = acc + a * wdw_ref[t:t + 1, :]
        acc = jnp.clip(acc + b2_ref[...], 0.0, 6.0)

        # ---- 3) 1x1 project conv (+ folded BN) on the MXU --------------------
        # stride==2: W-subsample is folded into the block-diagonal project
        # weight; the H-subsample is a tiny selection matmul (no strided slice).
        if stride == 2:
            acc = jnp.dot(sel_ref[...], acc, preferred_element_type=jnp.float32)
        out = jnp.dot(acc, w3_ref[...],
                      preferred_element_type=jnp.float32) + b3_ref[...]

        # ---- 4) residual connection (stride == 1 and Cin == Cout) ------------
        if use_res:
            out = out + x_ref[...].reshape(BH, WCin)   # lane-dense, re-read here

        # lane-dense store: (B*Ho, Wo*Cout) -> (B, Ho, Wo*Cout)
        o_ref[...] = out.reshape(B, Ho, WoC).astype(o_ref.dtype)

    return kernel, Ho, Wo


@partial(jax.jit, static_argnums=(2, 3, 4))
def inverted_residual_pallas(x_nchw, folded, stride, use_res, max_grid_steps):
    """x_nchw: (N, Cin, H, W) float32.  Returns (N, Cout, Ho, Wo).

    max_grid_steps: 2 keeps one "parallel" grid step per v7x TensorCore;
    pass 1 on v5e/v6e to fold the whole batch into a single fat step.
    """
    N, Cin, H, W = x_nchw.shape
    w1f, b1, wdwf, b2, w3f, b3 = folded
    Chid = w1f.shape[1]
    Cout = w3f.shape[1]

    # Batch folding: G grid steps of B images each; B*H rows fused into matmul M.
    G = max(1, min(max_grid_steps, N))
    B = pl.cdiv(N, G)
    G = pl.cdiv(N, B)
    N_pad = G * B

    kernel, Ho, Wo = _make_kernel(B, H, W, Cin, Chid, Cout, stride, use_res)

    # NCHW -> lane-dense (N, H, W*Cin).  When chaining blocks keep activations
    # in this layout between kernels and drop both boundary transposes.
    x_lane = jnp.transpose(x_nchw, (0, 2, 3, 1)).reshape(N, H, W * Cin)
    x_lane = x_lane.astype(jnp.float32)
    if N_pad != N:
        x_lane = jnp.pad(x_lane, ((0, N_pad - N), (0, 0), (0, 0)))

    # Block-diagonal 1x1 weights: everything stays 128-lane dense in-kernel and
    # the MXU uses the full K = W*Cin / W*Chid contraction depth.
    eyeW = jnp.eye(W, dtype=jnp.float32)
    w1_bd = jnp.einsum("jk,io->jiko", eyeW, w1f).reshape(W * Cin, W * Chid)
    selW = (jnp.arange(W)[:, None] ==
            stride * jnp.arange(Wo)[None, :]).astype(jnp.float32)   # (W, Wo)
    w3_bd = jnp.einsum("jk,io->jiko", selW, w3f).reshape(W * Chid, Wo * Cout)

    # Depthwise weights / biases pre-tiled along the fused lane axis.
    b1_t = jnp.tile(b1.reshape(1, Chid), (1, W))                  # (1, W*Chid)
    wdw_t = jnp.tile(wdwf.reshape(9, Chid), (1, W))               # (9, W*Chid)
    b2_t = jnp.tile(b2.reshape(1, Chid), (1, W))                  # (1, W*Chid)
    b3_t = jnp.tile(b3.reshape(1, Cout), (1, Wo))                 # (1, Wo*Cout)

    inputs = [x_lane, w1_bd, b1_t, wdw_t, b2_t, w3_bd, b3_t]
    in_specs = [
        pl.BlockSpec((B, H, W * Cin), lambda n: (n, 0, 0)),
        pl.BlockSpec((W * Cin, W * Chid), lambda n: (0, 0)),
        pl.BlockSpec((1, W * Chid), lambda n: (0, 0)),
        pl.BlockSpec((9, W * Chid), lambda n: (0, 0)),
        pl.BlockSpec((1, W * Chid), lambda n: (0, 0)),
        pl.BlockSpec((W * Chid, Wo * Cout), lambda n: (0, 0)),
        pl.BlockSpec((1, Wo * Cout), lambda n: (0, 0)),
    ]
    if stride == 2:
        # (B*Ho, B*H) row-selection matrix: folds the stride-2 H-subsample into
        # a tiny MXU matmul instead of a strided value slice.
        r = jnp.arange(B * Ho)
        src = (r // Ho) * H + (r % Ho) * stride
        selH = (jnp.arange(B * H)[None, :] == src[:, None]).astype(jnp.float32)
        inputs.append(selH)
        in_specs.append(pl.BlockSpec((B * Ho, B * H), lambda n: (0, 0)))

    out = pl.pallas_call(
        kernel,
        out_shape=jax.ShapeDtypeStruct((N_pad, Ho, Wo * Cout), jnp.float32),
        grid_spec=pltpu.PrefetchScalarGridSpec(
            num_scalar_prefetch=0,
            grid=(G,),
            in_specs=in_specs,
            out_specs=pl.BlockSpec((B, Ho, Wo * Cout), lambda n: (n, 0, 0)),
        ),
        compiler_params=pltpu.CompilerParams(
            dimension_semantics=("parallel",)),
    )(*inputs)

    # (N, Ho, Wo*Cout) -> NCHW.  The reshape is free; one transpose for the API.
    out = out[:N].reshape(N, Ho, Wo, Cout)
    return jnp.transpose(out, (0, 3, 1, 2))


# ----------------------------------------------------------------------------
# Parameter construction (deterministic) and BN folding (glue, plain JAX)
# ----------------------------------------------------------------------------
def make_params(key, inp, oup, expand_ratio):
    hidden = round(inp * expand_ratio)
    ks = jax.random.split(key, 15)

    def w(k, shape, fan_in):
        return jax.random.normal(k, shape, jnp.float32) / math.sqrt(fan_in)

    def bn(k1, k2, k3, k4, c):
        gamma = 0.5 + jax.random.uniform(k1, (c,), jnp.float32)
        beta = 0.1 * jax.random.normal(k2, (c,), jnp.float32)
        mean = 0.1 * jax.random.normal(k3, (c,), jnp.float32)
        var = 0.5 + jax.random.uniform(k4, (c,), jnp.float32)
        return gamma, beta, mean, var

    w1 = w(ks[0], (hidden, inp, 1, 1), inp)            # OIHW
    g1, be1, m1, v1 = bn(ks[1], ks[2], ks[3], ks[4], hidden)
    wdw = w(ks[5], (hidden, 1, 3, 3), 9)               # depthwise OIHW
    g2, be2, m2, v2 = bn(ks[6], ks[7], ks[8], ks[9], hidden)
    w3 = w(ks[10], (oup, hidden, 1, 1), hidden)        # OIHW
    g3, be3, m3, v3 = bn(ks[11], ks[12], ks[13], ks[14], oup)
    return (w1, g1, be1, m1, v1, wdw, g2, be2, m2, v2, w3, g3, be3, m3, v3)


def fold_bn(params):
    (w1, g1, be1, m1, v1, wdw, g2, be2, m2, v2, w3, g3, be3, m3, v3) = params
    s1 = g1 / jnp.sqrt(v1 + BN_EPS)
    b1 = be1 - m1 * s1
    w1f = jnp.transpose(w1[:, :, 0, 0]) * s1[None, :]                  # (Cin, Chid)

    s2 = g2 / jnp.sqrt(v2 + BN_EPS)
    b2 = be2 - m2 * s2
    wdwf = jnp.transpose(wdw[:, 0, :, :], (1, 2, 0)) * s2[None, None, :]  # (3,3,Chid)

    s3 = g3 / jnp.sqrt(v3 + BN_EPS)
    b3 = be3 - m3 * s3
    w3f = jnp.transpose(w3[:, :, 0, 0]) * s3[None, :]                  # (Chid, Cout)

    return (w1f, b1, wdwf, b2, w3f, b3)


# ----------------------------------------------------------------------------
# Pure-JAX reference (mirrors the PyTorch forward, eval-mode BN)
# ----------------------------------------------------------------------------
def ref_inverted_residual(x, params, stride, use_res):
    (w1, g1, be1, m1, v1, wdw, g2, be2, m2, v2, w3, g3, be3, m3, v3) = params

    def bn(y, g, b, m, v):
        sh = (1, -1, 1, 1)
        return (y - m.reshape(sh)) / jnp.sqrt(v.reshape(sh) + BN_EPS) \
            * g.reshape(sh) + b.reshape(sh)

    dn = ('NCHW', 'OIHW', 'NCHW')
    h = lax.conv_general_dilated(x, w1, (1, 1), 'VALID', dimension_numbers=dn)
    h = jnp.clip(bn(h, g1, be1, m1, v1), 0.0, 6.0)
    h = lax.conv_general_dilated(h, wdw, (stride, stride), ((1, 1), (1, 1)),
                                 dimension_numbers=dn,
                                 feature_group_count=wdw.shape[0])
    h = jnp.clip(bn(h, g2, be2, m2, v2), 0.0, 6.0)
    h = lax.conv_general_dilated(h, w3, (1, 1), 'VALID', dimension_numbers=dn)
    h = bn(h, g3, be3, m3, v3)
    return x + h if use_res else h


# ----------------------------------------------------------------------------
if __name__ == "__main__":
    key = jax.random.PRNGKey(0)

    # ---- Config A: InvertedResidual(inp=8, oup=8, stride=1, expand_ratio=4) --
    # Residual branch; Wo*Cout == 128 -> unmasked lane-dense stores.
    inp, oup, stride, expand_ratio = 8, 8, 1, 4
    use_res = (stride == 1) and (inp == oup)
    N, H, W = 2, 16, 16
    kx, kp, key = jax.random.split(key, 3)
    x = jax.random.normal(kx, (N, inp, H, W), jnp.float32)   # NCHW, like PyTorch
    params = make_params(kp, inp, oup, expand_ratio)
    folded = fold_bn(params)

    out = jax.block_until_ready(
        inverted_residual_pallas(x, folded, stride, use_res, 2))
    ref = ref_inverted_residual(x, params, stride, use_res)
    assert out.shape == ref.shape, (out.shape, ref.shape)
    assert jnp.allclose(out, ref, rtol=1e-4, atol=1e-4), \
        float(jnp.max(jnp.abs(out - ref)))

    # ---- Config B: InvertedResidual(inp=8, oup=16, stride=2, expand_ratio=4) -
    # Validates the stride-2 path flagged in review; N=4 with 2 grid steps
    # exercises batch folding (B=2 images / step); Wo*Cout == 128 keeps stores
    # unmasked.
    inp, oup, stride, expand_ratio = 8, 16, 2, 4
    use_res = (stride == 1) and (inp == oup)
    N, H, W = 4, 16, 16
    kx, kp, key = jax.random.split(key, 3)
    x = jax.random.normal(kx, (N, inp, H, W), jnp.float32)
    params = make_params(kp, inp, oup, expand_ratio)
    folded = fold_bn(params)

    out = jax.block_until_ready(
        inverted_residual_pallas(x, folded, stride, use_res, 2))
    ref = ref_inverted_residual(x, params, stride, use_res)
    assert out.shape == ref.shape, (out.shape, ref.shape)
    assert jnp.allclose(out, ref, rtol=1e-4, atol=1e-4), \
        float(jnp.max(jnp.abs(out - ref)))

    print("KERNEL_OK")
</pallas_src>

<mosaic_0001>
module attributes {stable_mosaic.version = 11 : i64} {
  func.func @kernel(%arg0: i32, %arg1: memref<1x16x128xf32, #tpu.memory_space<vmem>>, %arg2: memref<128x512xf32, #tpu.memory_space<vmem>>, %arg3: memref<1x512xf32, #tpu.memory_space<vmem>>, %arg4: memref<9x512xf32, #tpu.memory_space<vmem>>, %arg5: memref<1x512xf32, #tpu.memory_space<vmem>>, %arg6: memref<512x128xf32, #tpu.memory_space<vmem>>, %arg7: memref<1x128xf32, #tpu.memory_space<vmem>>, %arg8: memref<1x16x128xf32, #tpu.memory_space<vmem>>) attributes {dimension_semantics = [#tpu.dimension_semantics<parallel>], iteration_bounds = array<i64: 2>, scalar_prefetch = 0 : i64, scratch_operands = 0 : i64, tpu.core_type = #tpu.core_type<tc>, window_params = [{transform_indices = @transform_0, window_bounds = array<i64: 1, 16, 128>}, {pipeline_mode = #tpu.pipeline_mode<synchronous>, transform_indices = @transform_1, window_bounds = array<i64: 128, 512>}, {pipeline_mode = #tpu.pipeline_mode<synchronous>, transform_indices = @transform_2, window_bounds = array<i64: 1, 512>}, {pipeline_mode = #tpu.pipeline_mode<synchronous>, transform_indices = @transform_3, window_bounds = array<i64: 9, 512>}, {pipeline_mode = #tpu.pipeline_mode<synchronous>, transform_indices = @transform_4, window_bounds = array<i64: 1, 512>}, {pipeline_mode = #tpu.pipeline_mode<synchronous>, transform_indices = @transform_5, window_bounds = array<i64: 512, 128>}, {pipeline_mode = #tpu.pipeline_mode<synchronous>, transform_indices = @transform_6, window_bounds = array<i64: 1, 128>}, {transform_indices = @transform_7, window_bounds = array<i64: 1, 16, 128>}]} {
    %c0 = arith.constant 0 : index
    %c0_0 = arith.constant 0 : index
    %c0_1 = arith.constant 0 : index
    %0 = vector.load %arg1[%c0, %c0_0, %c0_1] : memref<1x16x128xf32, #tpu.memory_space<vmem>>, vector<1x16x128xf32>
    %1 = vector.shape_cast %0 : vector<1x16x128xf32> to vector<16x128xf32>
    %c0_2 = arith.constant 0 : index
    %c0_3 = arith.constant 0 : index
    %2 = vector.load %arg2[%c0_2, %c0_3] : memref<128x512xf32, #tpu.memory_space<vmem>>, vector<128x512xf32>
    %cst = arith.constant dense<0.000000e+00> : vector<16x512xf32>
    %3 = tpu.matmul %1, %2, %cst {dimension_numbers = #tpu.dot_dimension_numbers<[1], [0], [0], [1], [0, 0, 1, 1], [], []>} : vector<16x128xf32>, vector<128x512xf32>, vector<16x512xf32> -> vector<16x512xf32>
    %c0_4 = arith.constant 0 : index
    %c0_5 = arith.constant 0 : index
    %4 = vector.load %arg3[%c0_4, %c0_5] : memref<1x512xf32, #tpu.memory_space<vmem>>, vector<1x512xf32>
    %5 = vector.broadcast %4 : vector<1x512xf32> to vector<16x512xf32>
    %6 = arith.addf %3, %5 : vector<16x512xf32>
    %cst_6 = arith.constant 0.000000e+00 : f32
    %cst_7 = arith.constant 6.000000e+00 : f32
    %7 = vector.broadcast %cst_6 : f32 to vector<16x512xf32>
    %8 = arith.maximumf %7, %6 : vector<16x512xf32>
    %9 = vector.broadcast %cst_7 : f32 to vector<16x512xf32>
    %10 = arith.minimumf %9, %8 : vector<16x512xf32>
    %11 = tpu.iota {dimensions = array<i32: 1>} : vector<1x512xi32>
    %12 = tpu.iota {dimensions = array<i32: 0>} : vector<16x1xi32>
    %cst_8 = arith.constant 0.000000e+00 : f32
    %13 = vector.broadcast %cst_8 : f32 to vector<16x512xf32>
    %c1_i32 = arith.constant 1 : i32
    %14 = tpu.dynamic_rotate %10 by %c1_i32 dim 0 : vector<16x512xf32>, i32 -> vector<16x512xf32>
    %c0_i32 = arith.constant 0 : i32
    %15 = vector.broadcast %c0_i32 : i32 to vector<16x1xi32>
    %16 = arith.cmpi eq, %12, %15 : vector<16x1xi32>
    %cst_9 = arith.constant dense<true> : vector<16x1xi1>
    %17 = arith.xori %16, %cst_9 : vector<16x1xi1>
    %cst_10 = arith.constant 0.000000e+00 : f32
    %18 = vector.shape_cast %17 : vector<16x1xi1> to vector<16x1xi1>
    %19 = vector.broadcast %18 : vector<16x1xi1> to vector<16x512xi1>
    %20 = vector.broadcast %cst_10 : f32 to vector<16x512xf32>
    %21 = arith.select %19, %14, %20 : vector<16x512xi1>, vector<16x512xf32>
    %c32_i32 = arith.constant 32 : i32
    %22 = tpu.dynamic_rotate %21 by %c32_i32 dim 1 : vector<16x512xf32>, i32 -> vector<16x512xf32>
    %c32_i32_11 = arith.constant 32 : i32
    %23 = vector.broadcast %c32_i32_11 : i32 to vector<1x512xi32>
    %24 = arith.cmpi sge, %11, %23 : vector<1x512xi32>
    %cst_12 = arith.constant 0.000000e+00 : f32
    %25 = vector.shape_cast %24 : vector<1x512xi1> to vector<1x512xi1>
    %26 = vector.broadcast %25 : vector<1x512xi1> to vector<16x512xi1>
    %27 = vector.broadcast %cst_12 : f32 to vector<16x512xf32>
    %28 = arith.select %26, %22, %27 : vector<16x512xi1>, vector<16x512xf32>
    %c0_13 = arith.constant 0 : index
    %c0_14 = arith.constant 0 : index
    %29 = vector.load %arg4[%c0_13, %c0_14] : memref<9x512xf32, #tpu.memory_space<vmem>>, vector<1x512xf32>
    %30 = vector.broadcast %29 : vector<1x512xf32> to vector<16x512xf32>
    %31 = arith.mulf %28, %30 : vector<16x512xf32>
    %32 = arith.addf %13, %31 : vector<16x512xf32>
    %c1 = arith.constant 1 : index
    %c0_15 = arith.constant 0 : index
    %33 = vector.load %arg4[%c1, %c0_15] : memref<9x512xf32, #tpu.memory_space<vmem>>, vector<1x512xf32>
    %34 = vector.broadcast %33 : vector<1x512xf32> to vector<16x512xf32>
    %35 = arith.mulf %21, %34 : vector<16x512xf32>
    %36 = arith.addf %32, %35 : vector<16x512xf32>
    %c480_i32 = arith.constant 480 : i32
    %37 = tpu.dynamic_rotate %21 by %c480_i32 dim 1 : vector<16x512xf32>, i32 -> vector<16x512xf32>
    %c480_i32_16 = arith.constant 480 : i32
    %38 = vector.broadcast %c480_i32_16 : i32 to vector<1x512xi32>
    %39 = arith.cmpi slt, %11, %38 : vector<1x512xi32>
    %cst_17 = arith.constant 0.000000e+00 : f32
    %40 = vector.shape_cast %39 : vector<1x512xi1> to vector<1x512xi1>
    %41 = vector.broadcast %40 : vector<1x512xi1> to vector<16x512xi1>
    %42 = vector.broadcast %cst_17 : f32 to vector<16x512xf32>
    %43 = arith.select %41, %37, %42 : vector<16x512xi1>, vector<16x512xf32>
    %c2 = arith.constant 2 : index
    %c0_18 = arith.constant 0 : index
    %44 = vector.load %arg4[%c2, %c0_18] : memref<9x512xf32, #tpu.memory_space<vmem>>, vector<1x512xf32>
    %45 = vector.broadcast %44 : vector<1x512xf32> to vector<16x512xf32>
    %46 = arith.mulf %43, %45 : vector<16x512xf32>
    %47 = arith.addf %36, %46 : vector<16x512xf32>
    %c32_i32_19 = arith.constant 32 : i32
    %48 = tpu.dynamic_rotate %10 by %c32_i32_19 dim 1 : vector<16x512xf32>, i32 -> vector<16x512xf32>
    %c32_i32_20 = arith.constant 32 : i32
    %49 = vector.broadcast %c32_i32_20 : i32 to vector<1x512xi32>
    %50 = arith.cmpi sge, %11, %49 : vector<1x512xi32>
    %cst_21 = arith.constant 0.000000e+00 : f32
    %51 = vector.shape_cast %50 : vector<1x512xi1> to vector<1x512xi1>
    %52 = vector.broadcast %51 : vector<1x512xi1> to vector<16x512xi1>
    %53 = vector.broadcast %cst_21 : f32 to vector<16x512xf32>
    %54 = arith.select %52, %48, %53 : vector<16x512xi1>, vector<16x512xf32>
    %c3 = arith.constant 3 : index
    %c0_22 = arith.constant 0 : index
    %55 = vector.load %arg4[%c3, %c0_22] : memref<9x512xf32, #tpu.memory_space<vmem>>, vector<1x512xf32>
    %56 = vector.broadcast %55 : vector<1x512xf32> to vector<16x512xf32>
    %57 = arith.mulf %54, %56 : vector<16x512xf32>
    %58 = arith.addf %47, %57 : vector<16x512xf32>
    %c4 = arith.constant 4 : index
    %c0_23 = arith.constant 0 : index
    %59 = vector.load %arg4[%c4, %c0_23] : memref<9x512xf32, #tpu.memory_space<vmem>>, vector<1x512xf32>
    %60 = vector.broadcast %59 : vector<1x512xf32> to vector<16x512xf32>
    %61 = arith.mulf %10, %60 : vector<16x512xf32>
    %62 = arith.addf %58, %61 : vector<16x512xf32>
    %c480_i32_24 = arith.constant 480 : i32
    %63 = tpu.dynamic_rotate %10 by %c480_i32_24 dim 1 : vector<16x512xf32>, i32 -> vector<16x512xf32>
    %c480_i32_25 = arith.constant 480 : i32
    %64 = vector.broadcast %c480_i32_25 : i32 to vector<1x512xi32>
    %65 = arith.cmpi slt, %11, %64 : vector<1x512xi32>
    %cst_26 = arith.constant 0.000000e+00 : f32
    %66 = vector.shape_cast %65 : vector<1x512xi1> to vector<1x512xi1>
    %67 = vector.broadcast %66 : vector<1x512xi1> to vector<16x512xi1>
    %68 = vector.broadcast %cst_26 : f32 to vector<16x512xf32>
    %69 = arith.select %67, %63, %68 : vector<16x512xi1>, vector<16x512xf32>
    %c5 = arith.constant 5 : index
    %c0_27 = arith.constant 0 : index
    %70 = vector.load %arg4[%c5, %c0_27] : memref<9x512xf32, #tpu.memory_space<vmem>>, vector<1x512xf32>
    %71 = vector.broadcast %70 : vector<1x512xf32> to vector<16x512xf32>
    %72 = arith.mulf %69, %71 : vector<16x512xf32>
    %73 = arith.addf %62, %72 : vector<16x512xf32>
    %c15_i32 = arith.constant 15 : i32
    %74 = tpu.dynamic_rotate %10 by %c15_i32 dim 0 : vector<16x512xf32>, i32 -> vector<16x512xf32>
    %c15_i32_28 = arith.constant 15 : i32
    %75 = vector.broadcast %c15_i32_28 : i32 to vector<16x1xi32>
    %76 = arith.cmpi eq, %12, %75 : vector<16x1xi32>
    %cst_29 = arith.constant dense<true> : vector<16x1xi1>
    %77 = arith.xori %76, %cst_29 : vector<16x1xi1>
    %cst_30 = arith.constant 0.000000e+00 : f32
    %78 = vector.shape_cast %77 : vector<16x1xi1> to vector<16x1xi1>
    %79 = vector.broadcast %78 : vector<16x1xi1> to vector<16x512xi1>
    %80 = vector.broadcast %cst_30 : f32 to vector<16x512xf32>
    %81 = arith.select %79, %74, %80 : vector<16x512xi1>, vector<16x512xf32>
    %c32_i32_31 = arith.constant 32 : i32
    %82 = tpu.dynamic_rotate %81 by %c32_i32_31 dim 1 : vector<16x512xf32>, i32 -> vector<16x512xf32>
    %c32_i32_32 = arith.constant 32 : i32
    %83 = vector.broadcast %c32_i32_32 : i32 to vector<1x512xi32>
    %84 = arith.cmpi sge, %11, %83 : vector<1x512xi32>
    %cst_33 = arith.constant 0.000000e+00 : f32
    %85 = vector.shape_cast %84 : vector<1x512xi1> to vector<1x512xi1>
    %86 = vector.broadcast %85 : vector<1x512xi1> to vector<16x512xi1>
    %87 = vector.broadcast %cst_33 : f32 to vector<16x512xf32>
    %88 = arith.select %86, %82, %87 : vector<16x512xi1>, vector<16x512xf32>
    %c6 = arith.constant 6 : index
    %c0_34 = arith.constant 0 : index
    %89 = vector.load %arg4[%c6, %c0_34] : memref<9x512xf32, #tpu.memory_space<vmem>>, vector<1x512xf32>
    %90 = vector.broadcast %89 : vector<1x512xf32> to vector<16x512xf32>
    %91 = arith.mulf %88, %90 : vector<16x512xf32>
    %92 = arith.addf %73, %91 : vector<16x512xf32>
    %c7 = arith.constant 7 : index
    %c0_35 = arith.constant 0 : index
    %93 = vector.load %arg4[%c7, %c0_35] : memref<9x512xf32, #tpu.memory_space<vmem>>, vector<1x512xf32>
    %94 = vector.broadcast %93 : vector<1x512xf32> to vector<16x512xf32>
    %95 = arith.mulf %81, %94 : vector<16x512xf32>
    %96 = arith.addf %92, %95 : vector<16x512xf32>
    %c480_i32_36 = arith.constant 480 : i32
    %97 = tpu.dynamic_rotate %81 by %c480_i32_36 dim 1 : vector<16x512xf32>, i32 -> vector<16x512xf32>
    %c480_i32_37 = arith.constant 480 : i32
    %98 = vector.broadcast %c480_i32_37 : i32 to vector<1x512xi32>
    %99 = arith.cmpi slt, %11, %98 : vector<1x512xi32>
    %cst_38 = arith.constant 0.000000e+00 : f32
    %100 = vector.shape_cast %99 : vector<1x512xi1> to vector<1x512xi1>
    %101 = vector.broadcast %100 : vector<1x512xi1> to vector<16x512xi1>
    %102 = vector.broadcast %cst_38 : f32 to vector<16x512xf32>
    %103 = arith.select %101, %97, %102 : vector<16x512xi1>, vector<16x512xf32>
    %c8 = arith.constant 8 : index
    %c0_39 = arith.constant 0 : index
    %104 = vector.load %arg4[%c8, %c0_39] : memref<9x512xf32, #tpu.memory_space<vmem>>, vector<1x512xf32>
    %105 = vector.broadcast %104 : vector<1x512xf32> to vector<16x512xf32>
    %106 = arith.mulf %103, %105 : vector<16x512xf32>
    %107 = arith.addf %96, %106 : vector<16x512xf32>
    %c0_40 = arith.constant 0 : index
    %c0_41 = arith.constant 0 : index
    %108 = vector.load %arg5[%c0_40, %c0_41] : memref<1x512xf32, #tpu.memory_space<vmem>>, vector<1x512xf32>
    %109 = vector.broadcast %108 : vector<1x512xf32> to vector<16x512xf32>
    %110 = arith.addf %107, %109 : vector<16x512xf32>
    %cst_42 = arith.constant 0.000000e+00 : f32
    %cst_43 = arith.constant 6.000000e+00 : f32
    %111 = vector.broadcast %cst_42 : f32 to vector<16x512xf32>
    %112 = arith.maximumf %111, %110 : vector<16x512xf32>
    %113 = vector.broadcast %cst_43 : f32 to vector<16x512xf32>
    %114 = arith.minimumf %113, %112 : vector<16x512xf32>
    %c0_44 = arith.constant 0 : index
    %c0_45 = arith.constant 0 : index
    %115 = vector.load %arg6[%c0_44, %c0_45] : memref<512x128xf32, #tpu.memory_space<vmem>>, vector<512x128xf32>
    %cst_46 = arith.constant dense<0.000000e+00> : vector<16x128xf32>
    %116 = tpu.matmul %114, %115, %cst_46 {dimension_numbers = #tpu.dot_dimension_numbers<[1], [0], [0], [1], [0, 0, 1, 1], [], []>} : vector<16x512xf32>, vector<512x128xf32>, vector<16x128xf32> -> vector<16x128xf32>
    %c0_47 = arith.constant 0 : index
    %c0_48 = arith.constant 0 : index
    %117 = vector.load %arg7[%c0_47, %c0_48] : memref<1x128xf32, #tpu.memory_space<vmem>>, vector<1x128xf32>
    %118 = vector.broadcast %117 : vector<1x128xf32> to vector<16x128xf32>
    %119 = arith.addf %116, %118 : vector<16x128xf32>
    %c0_49 = arith.constant 0 : index
    %c0_50 = arith.constant 0 : index
    %c0_51 = arith.constant 0 : index
    %120 = vector.load %arg1[%c0_49, %c0_50, %c0_51] : memref<1x16x128xf32, #tpu.memory_space<vmem>>, vector<1x16x128xf32>
    %121 = vector.shape_cast %120 : vector<1x16x128xf32> to vector<16x128xf32>
    %122 = arith.addf %119, %121 : vector<16x128xf32>
    %123 = vector.shape_cast %122 : vector<16x128xf32> to vector<1x16x128xf32>
    %c0_52 = arith.constant 0 : index
    %c0_53 = arith.constant 0 : index
    %c0_54 = arith.constant 0 : index
    %124 = vector.load %arg8[%c0_52, %c0_53, %c0_54] : memref<1x16x128xf32, #tpu.memory_space<vmem>>, vector<1x16x128xf32>
    tpu.vector_store %arg8[%c0_52, %c0_53, %c0_54], %123 {strides = array<i32>} : memref<1x16x128xf32, #tpu.memory_space<vmem>>, vector<1x16x128xf32>,
    return
  }
  func.func @transform_0(%arg0: i32) -> (i32, i32, i32) {
    %c0_i32 = arith.constant 0 : i32
    %c0_i32_0 = arith.constant 0 : i32
    %c0_i32_1 = arith.constant 0 : i32
    return %arg0, %c0_i32, %c0_i32_0 : i32, i32, i32
  }
  func.func @transform_1(%arg0: i32) -> (i32, i32) {
    %c0_i32 = arith.constant 0 : i32
    %c0_i32_0 = arith.constant 0 : i32
    %c0_i32_1 = arith.constant 0 : i32
    return %c0_i32, %c0_i32_0 : i32, i32
  }
  func.func @transform_2(%arg0: i32) -> (i32, i32) {
    %c0_i32 = arith.constant 0 : i32
    %c0_i32_0 = arith.constant 0 : i32
    %c0_i32_1 = arith.constant 0 : i32
    return %c0_i32, %c0_i32_0 : i32, i32
  }
  func.func @transform_3(%arg0: i32) -> (i32, i32) {
    %c0_i32 = arith.constant 0 : i32
    %c0_i32_0 = arith.constant 0 : i32
    %c0_i32_1 = arith.constant 0 : i32
    return %c0_i32, %c0_i32_0 : i32, i32
  }
  func.func @transform_4(%arg0: i32) -> (i32, i32) {
    %c0_i32 = arith.constant 0 : i32
    %c0_i32_0 = arith.constant 0 : i32
    %c0_i32_1 = arith.constant 0 : i32
    return %c0_i32, %c0_i32_0 : i32, i32
  }
  func.func @transform_5(%arg0: i32) -> (i32, i32) {
    %c0_i32 = arith.constant 0 : i32
    %c0_i32_0 = arith.constant 0 : i32
    %c0_i32_1 = arith.constant 0 : i32
    return %c0_i32, %c0_i32_0 : i32, i32
  }
  func.func @transform_6(%arg0: i32) -> (i32, i32) {
    %c0_i32 = arith.constant 0 : i32
    %c0_i32_0 = arith.constant 0 : i32
    %c0_i32_1 = arith.constant 0 : i32
    return %c0_i32, %c0_i32_0 : i32, i32
  }
  func.func @transform_7(%arg0: i32) -> (i32, i32, i32) {
    %c0_i32 = arith.constant 0 : i32
    %c0_i32_0 = arith.constant 0 : i32
    %c0_i32_1 = arith.constant 0 : i32
    return %arg0, %c0_i32, %c0_i32_0 : i32, i32, i32
  }
}

</mosaic_0001>

<llo_original>
// kernel: tile.23
$region0: #{tile.23}
  %s0 = inlined_call_operand.vmem [shape: f32[9,16,32], index: 0, kind: input, shape index: {}]
  %s1 = inlined_call_operand.vmem [shape: f32[9,512], index: 1, kind: output, shape index: {}]
  %v2 = vld [vmem:[%s0] ss:$4 sm:$0xff]
  %vm3 = vcmask 261120
  %4 = vst.msk [vmem:[%s1] ss:$8 sm:$0xf] %vm3, %v2
  %s5 = scalar_lea.vmem %s1, 4294967265
  %6 = vst.msk [vmem:[%s5] ss:$8 sm:$0xf0] %vm3, %v2
  %s7 = scalar_lea.vmem %s0, 32
  %v8 = vld [vmem:[%s7] ss:$4 sm:$0xff]
  %vm9 = vcmask 261120
  %s10 = scalar_lea.vmem %s1, 2
  %11 = vst.msk [vmem:[%s10] ss:$8 sm:$0xf] %vm9, %v8
  %s12 = scalar_lea.vmem %s1, 4294967267
  %13 = vst.msk [vmem:[%s12] ss:$8 sm:$0xf0] %vm9, %v8
  %s14 = scalar_lea.vmem %s0, 64
  %v15 = vld [vmem:[%s14] ss:$4 sm:$0xff]
  %vm16 = vcmask 261120
  %s17 = scalar_lea.vmem %s1, 4
  %18 = vst.msk [vmem:[%s17] ss:$8 sm:$0xf] %vm16, %v15
  %s19 = scalar_lea.vmem %s1, 4294967269
  %20 = vst.msk [vmem:[%s19] ss:$8 sm:$0xf0] %vm16, %v15
  %s21 = scalar_lea.vmem %s0, 96
  %v22 = vld [vmem:[%s21] ss:$4 sm:$0xff]
  %vm23 = vcmask 261120
  %s24 = scalar_lea.vmem %s1, 6
  %25 = vst.msk [vmem:[%s24] ss:$8 sm:$0xf] %vm23, %v22
  %s26 = scalar_lea.vmem %s1, 4294967271
  %27 = vst.msk [vmem:[%s26] ss:$8 sm:$0xf0] %vm23, %v22
  %s28 = scalar_lea.vmem %s0, 128
  %v29 = vld [vmem:[%s28] ss:$4 sm:$0xf]
  %vm30 = vcmask 261120
  %s31 = scalar_lea.vmem %s1, 32
  %32 = vst.msk [vmem:[%s31] ss:$8 sm:$0xf] %vm30, %v29
  %s33 = scalar_lea.vmem %s0, 3
  %s34 = smov 3
  %v35 = vld [vmem:[%s33] ss:$16 sm:%s34]
  %s36 = scalar_lea.vmem %s0, 3
  %s37 = smov 12
  %v38 = vld [vmem:[%s36] ss:$16 sm:%s37]
  %vm39 = vcmask 1043458
  %v40 = vsel %vm39, %v38, %v35
  %s41 = scalar_lea.vmem %s0, 3
  %s42 = smov 48
  %v43 = vld [vmem:[%s41] ss:$16 sm:%s42]
  %vm44 = vcmask 1045508
  %v45 = vsel %vm44, %v43, %v40
  %s46 = scalar_lea.vmem %s0, 3
  %s47 = smov 192
  %v48 = vld [vmem:[%s46] ss:$16 sm:%s47]
  %vm49 = vcmask 1047558
  %v50 = vsel %vm49, %v48, %v45
  %51 = vrot.lane.b32.xlu0 %v50, 96
  %v52 = vpop.permute.xlu0 %51
  %vm53 = vcmask 1048320
  %54 = vst.msk [vmem:[%s1] sm:$0xff] %vm53, %v52
  %s55 = scalar_lea.vmem %s0, 131
  %s56 = smov 3
  %v57 = vld [vmem:[%s55] ss:$-124 sm:%s56]
  %s58 = scalar_lea.vmem %s0, 4294967287
  %s59 = smov 12
  %v60 = vld [vmem:[%s58] ss:$16 sm:%s59]
  %vm61 = vcmask 1043458
  %v62 = vsel %vm61, %v60, %v57
  %s63 = scalar_lea.vmem %s0, 4294967287
  %s64 = smov 48
  %v65 = vld [vmem:[%s63] ss:$16 sm:%s64]
  %vm66 = vcmask 1045508
  %v67 = vsel %vm66, %v65, %v62
  %s68 = scalar_lea.vmem %s0, 4294967287
  %s69 = smov 192
  %v70 = vld [vmem:[%s68] ss:$16 sm:%s69]
  %vm71 = vcmask 1047558
  %v72 = vsel %vm71, %v70, %v67
  %73 = vrot.lane.b32.xlu0 %v72, 96
  %v74 = vpop.permute.xlu0 %73
  %vm75 = vcmask 1048320
  %s76 = scalar_lea.vmem %s1, 32
  %77 = vst.msk [vmem:[%s76] ss:$-24 sm:$0x3] %vm75, %v74
  %s78 = scalar_lea.vmem %s1, 7
  %79 = vst.msk [vmem:[%s78] sm:$0xfc] %vm75, %v74
  %s80 = scalar_lea.vmem %s0, 135
  %s81 = smov 3
  %v82 = vld [vmem:[%s80] ss:$-16 sm:%s81]
  %s83 = scalar_lea.vmem %s0, 4294967275
  %s84 = smov 12
  %v85 = vld [vmem:[%s83] ss:$16 sm:%s84]
  %vm86 = vcmask 1043458
  %v87 = vsel %vm86, %v85, %v82
  %s88 = scalar_lea.vmem %s0, 4294967275
  %s89 = smov 48
  %v90 = vld [vmem:[%s88] ss:$16 sm:%s89]
  %vm91 = vcmask 1045508
  %v92 = vsel %vm91, %v90, %v87
  %s93 = scalar_lea.vmem %s0, 4294967275
  %s94 = smov 192
  %v95 = vld [vmem:[%s93] ss:$16 sm:%s94]
  %vm96 = vcmask 1047558
  %v97 = vsel %vm96, %v95, %v92
  %98 = vrot.lane.b32.xlu0 %v97, 96
  %v99 = vpop.permute.xlu0 %98
  %vm100 = vcmask 1048320
  %s101 = scalar_lea.vmem %s1, 40
  %102 = vst.msk [vmem:[%s101] ss:$-25 sm:$0x3] %vm100, %v99
  %s103 = scalar_lea.vmem %s1, 14
  %104 = vst.msk [vmem:[%s103] sm:$0xfc] %vm100, %v99
  %s105 = scalar_lea.vmem %s0, 139
  %v106 = vld [vmem:[%s105] sm:$0x1]
  %s107 = scalar_lea.vmem %s0, 91
  %s108 = smov 6
  %v109 = vld [vmem:[%s107] ss:$16 sm:%s108]
  %vm110 = vcmask 1042433
  %v111 = vsel %vm110, %v109, %v106
  %s112 = scalar_lea.vmem %s0, 4294967263
  %s113 = smov 24
  %v114 = vld [vmem:[%s112] ss:$16 sm:%s113]
  %vm115 = vcmask 1044483
  %v116 = vsel %vm115, %v114, %v111
  %s117 = scalar_lea.vmem %s0, 4294967263
  %s118 = smov 96
  %v119 = vld [vmem:[%s117] ss:$16 sm:%s118]
  %vm120 = vcmask 1046533
  %v121 = vsel %vm120, %v119, %v116
  %s122 = scalar_lea.vmem %s0, 72
  %v123 = vld [vmem:[%s122] sm:$0x80]
  %vm124 = vcmask 1047559
  %v125 = vsel %vm124, %v123, %v121
  %126 = vrot.lane.b32.xlu0 %v125, 96
  %v127 = vpop.permute.xlu0 %126
  %vm128 = vcmask 1048320
  %s129 = scalar_lea.vmem %s1, 48
  %130 = vst.msk [vmem:[%s129] ss:$-26 sm:$0x3] %vm128, %v127
  %s131 = scalar_lea.vmem %s1, 21
  %132 = vst.msk [vmem:[%s131] sm:$0xfc] %vm128, %v127
  %s133 = scalar_lea.vmem %s0, 143
  %s134 = smov 3
  %v135 = vld [vmem:[%s133] ss:$-48 sm:%s134]
  %s136 = scalar_lea.vmem %s0, 79
  %s137 = smov 12
  %v138 = vld [vmem:[%s136] ss:$16 sm:%s137]
  %vm139 = vcmask 1043458
  %v140 = vsel %vm139, %v138, %v135
  %141 = vrot.lane.b32.xlu0 %v140, 96
  %v142 = vpop.permute.xlu0 %141
  %vm143 = vcmask 1048320
  %s144 = scalar_lea.vmem %s1, 56
  %145 = vst.msk [vmem:[%s144] ss:$-27 sm:$0x3] %vm143, %v142
  %s146 = scalar_lea.vmem %s1, 28
  %147 = vst.msk [vmem:[%s146] sm:$0xc] %vm143, %v142
  %s148 = scalar_lea.vmem %s0, 2
  %s149 = smov 3
  %v150 = vld [vmem:[%s148] ss:$16 sm:%s149]
  %s151 = scalar_lea.vmem %s0, 2
  %s152 = smov 12
  %v153 = vld [vmem:[%s151] ss:$16 sm:%s152]
  %vm154 = vcmask 1043458
  %v155 = vsel %vm154, %v153, %v150
  %s156 = scalar_lea.vmem %s0, 2
  %s157 = smov 48
  %v158 = vld [vmem:[%s156] ss:$16 sm:%s157]
  %vm159 = vcmask 1045508
  %v160 = vsel %vm159, %v158, %v155
  %s161 = scalar_lea.vmem %s0, 2
  %s162 = smov 192
  %v163 = vld [vmem:[%s161] ss:$16 sm:%s162]
  %vm164 = vcmask 1047558
  %v165 = vsel %vm164, %v163, %v160
  %166 = vrot.lane.b32.xlu0 %v165, 64
  %v167 = vpop.permute.xlu0 %166
  %vm168 = vcmask 785920
  %169 = vst.msk [vmem:[%s1] sm:$0xff] %vm168, %v167
  %s170 = scalar_lea.vmem %s0, 130
  %s171 = smov 3
  %v172 = vld [vmem:[%s170] ss:$-124 sm:%s171]
  %s173 = scalar_lea.vmem %s0, 4294967286
  %s174 = smov 12
  %v175 = vld [vmem:[%s173] ss:$16 sm:%s174]
  %vm176 = vcmask 1043458
  %v177 = vsel %vm176, %v175, %v172
  %s178 = scalar_lea.vmem %s0, 4294967286
  %s179 = smov 48
  %v180 = vld [vmem:[%s178] ss:$16 sm:%s179]
  %vm181 = vcmask 1045508
  %v182 = vsel %vm181, %v180, %v177
  %s183 = scalar_lea.vmem %s0, 4294967286
  %s184 = smov 192
  %v185 = vld [vmem:[%s183] ss:$16 sm:%s184]
  %vm186 = vcmask 1047558
  %v187 = vsel %vm186, %v185, %v182
  %188 = vrot.lane.b32.xlu0 %v187, 64
  %v189 = vpop.permute.xlu0 %188
  %vm190 = vcmask 785920
  %s191 = scalar_lea.vmem %s1, 32
  %192 = vst.msk [vmem:[%s191] ss:$-24 sm:$0x3] %vm190, %v189
  %s193 = scalar_lea.vmem %s1, 7
  %194 = vst.msk [vmem:[%s193] sm:$0xfc] %vm190, %v189
  %s195 = scalar_lea.vmem %s0, 134
  %s196 = smov 3
  %v197 = vld [vmem:[%s195] ss:$-16 sm:%s196]
  %s198 = scalar_lea.vmem %s0, 4294967274
  %s199 = smov 12
  %v200 = vld [vmem:[%s198] ss:$16 sm:%s199]
  %vm201 = vcmask 1043458
  %v202 = vsel %vm201, %v200, %v197
  %s203 = scalar_lea.vmem %s0, 4294967274
  %s204 = smov 48
  %v205 = vld [vmem:[%s203] ss:$16 sm:%s204]
  %vm206 = vcmask 1045508
  %v207 = vsel %vm206, %v205, %v202
  %s208 = scalar_lea.vmem %s0, 4294967274
  %s209 = smov 192
  %v210 = vld [vmem:[%s208] ss:$16 sm:%s209]
  %vm211 = vcmask 1047558
  %v212 = vsel %vm211, %v210, %v207
  %213 = vrot.lane.b32.xlu0 %v212, 64
  %v214 = vpop.permute.xlu0 %213
  %vm215 = vcmask 785920
  %s216 = scalar_lea.vmem %s1, 40
  %217 = vst.msk [vmem:[%s216] ss:$-25 sm:$0x3] %vm215, %v214
  %s218 = scalar_lea.vmem %s1, 14
  %219 = vst.msk [vmem:[%s218] sm:$0xfc] %vm215, %v214
  %s220 = scalar_lea.vmem %s0, 138
  %v221 = vld [vmem:[%s220] sm:$0x1]
  %s222 = scalar_lea.vmem %s0, 90
  %s223 = smov 6
  %v224 = vld [vmem:[%s222] ss:$16 sm:%s223]
  %vm225 = vcmask 1042433
  %v226 = vsel %vm225, %v224, %v221
  %s227 = scalar_lea.vmem %s0, 4294967262
  %s228 = smov 24
  %v229 = vld [vmem:[%s227] ss:$16 sm:%s228]
  %vm230 = vcmask 1044483
  %v231 = vsel %vm230, %v229, %v226
  %s232 = scalar_lea.vmem %s0, 4294967262
  %s233 = smov 96
  %v234 = vld [vmem:[%s232] ss:$16 sm:%s233]
  %vm235 = vcmask 1046533
  %v236 = vsel %vm235, %v234, %v231
  %s237 = scalar_lea.vmem %s0, 71
  %v238 = vld [vmem:[%s237] sm:$0x80]
  %vm239 = vcmask 1047559
  %v240 = vsel %vm239, %v238, %v236
  %241 = vrot.lane.b32.xlu0 %v240, 64
  %v242 = vpop.permute.xlu0 %241
  %vm243 = vcmask 785920
  %s244 = scalar_lea.vmem %s1, 48
  %245 = vst.msk [vmem:[%s244] ss:$-26 sm:$0x3] %vm243, %v242
  %s246 = scalar_lea.vmem %s1, 21
  %247 = vst.msk [vmem:[%s246] sm:$0xfc] %vm243, %v242
  %s248 = scalar_lea.vmem %s0, 142
  %s249 = smov 3
  %v250 = vld [vmem:[%s248] ss:$-48 sm:%s249]
  %s251 = scalar_lea.vmem %s0, 78
  %s252 = smov 12
  %v253 = vld [vmem:[%s251] ss:$16 sm:%s252]
  %vm254 = vcmask 1043458
  %v255 = vsel %vm254, %v253, %v250
  %256 = vrot.lane.b32.xlu0 %v255, 64
  %v257 = vpop.permute.xlu0 %256
  %vm258 = vcmask 785920
  %s259 = scalar_lea.vmem %s1, 56
  %260 = vst.msk [vmem:[%s259] ss:$-27 sm:$0x3] %vm258, %v257
  %s261 = scalar_lea.vmem %s1, 28
  %262 = vst.msk [vmem:[%s261] sm:$0xc] %vm258, %v257
  %s263 = scalar_lea.vmem %s0, 1
  %s264 = smov 3
  %v265 = vld [vmem:[%s263] ss:$16 sm:%s264]
  %s266 = scalar_lea.vmem %s0, 1
  %s267 = smov 12
  %v268 = vld [vmem:[%s266] ss:$16 sm:%s267]
  %vm269 = vcmask 1043458
  %v270 = vsel %vm269, %v268, %v265
  %s271 = scalar_lea.vmem %s0, 1
  %s272 = smov 48
  %v273 = vld [vmem:[%s271] ss:$16 sm:%s272]
  %vm274 = vcmask 1045508
  %v275 = vsel %vm274, %v273, %v270
  %s276 = scalar_lea.vmem %s0, 1
  %s277 = smov 192
  %v278 = vld [vmem:[%s276] ss:$16 sm:%s277]
  %vm279 = vcmask 1047558
  %v280 = vsel %vm279, %v278, %v275
  %281 = vrot.lane.b32.xlu0 %v280, 32
  %v282 = vpop.permute.xlu0 %281
  %vm283 = vcmask 523520
  %284 = vst.msk [vmem:[%s1] sm:$0xff] %vm283, %v282
  %s285 = scalar_lea.vmem %s0, 129
  %s286 = smov 3
  %v287 = vld [vmem:[%s285] ss:$-124 sm:%s286]
  %s288 = scalar_lea.vmem %s0, 4294967285
  %s289 = smov 12
  %v290 = vld [vmem:[%s288] ss:$16 sm:%s289]
  %vm291 = vcmask 1043458
  %v292 = vsel %vm291, %v290, %v287
  %s293 = scalar_lea.vmem %s0, 4294967285
  %s294 = smov 48
  %v295 = vld [vmem:[%s293] ss:$16 sm:%s294]
  %vm296 = vcmask 1045508
  %v297 = vsel %vm296, %v295, %v292
  %s298 = scalar_lea.vmem %s0, 4294967285
  %s299 = smov 192
  %v300 = vld [vmem:[%s298] ss:$16 sm:%s299]
  %vm301 = vcmask 1047558
  %v302 = vsel %vm301, %v300, %v297
  %303 = vrot.lane.b32.xlu0 %v302, 32
  %v304 = vpop.permute.xlu0 %303
  %vm305 = vcmask 523520
  %s306 = scalar_lea.vmem %s1, 32
  %307 = vst.msk [vmem:[%s306] ss:$-24 sm:$0x3] %vm305, %v304
  %s308 = scalar_lea.vmem %s1, 7
  %309 = vst.msk [vmem:[%s308] sm:$0xfc] %vm305, %v304
  %s310 = scalar_lea.vmem %s0, 133
  %s311 = smov 3
  %v312 = vld [vmem:[%s310] ss:$-16 sm:%s311]
  %s313 = scalar_lea.vmem %s0, 4294967273
  %s314 = smov 12
  %v315 = vld [vmem:[%s313] ss:$16 sm:%s314]
  %vm316 = vcmask 1043458
  %v317 = vsel %vm316, %v315, %v312
  %s318 = scalar_lea.vmem %s0, 4294967273
  %s319 = smov 48
  %v320 = vld [vmem:[%s318] ss:$16 sm:%s319]
  %vm321 = vcmask 1045508
  %v322 = vsel %vm321, %v320, %v317
  %s323 = scalar_lea.vmem %s0, 4294967273
  %s324 = smov 192
  %v325 = vld [vmem:[%s323] ss:$16 sm:%s324]
  %vm326 = vcmask 1047558
  %v327 = vsel %vm326, %v325, %v322
  %328 = vrot.lane.b32.xlu0 %v327, 32
  %v329 = vpop.permute.xlu0 %328
  %vm330 = vcmask 523520
  %s331 = scalar_lea.vmem %s1, 40
  %332 = vst.msk [vmem:[%s331] ss:$-25 sm:$0x3] %vm330, %v329
  %s333 = scalar_lea.vmem %s1, 14
  %334 = vst.msk [vmem:[%s333] sm:$0xfc] %vm330, %v329
  %s335 = scalar_lea.vmem %s0, 137
  %v336 = vld [vmem:[%s335] sm:$0x1]
  %s337 = scalar_lea.vmem %s0, 89
  %s338 = smov 6
  %v339 = vld [vmem:[%s337] ss:$16 sm:%s338]
  %vm340 = vcmask 1042433
  %v341 = vsel %vm340, %v339, %v336
  %s342 = scalar_lea.vmem %s0, 4294967261
  %s343 = smov 24
  %v344 = vld [vmem:[%s342] ss:$16 sm:%s343]
  %vm345 = vcmask 1044483
  %v346 = vsel %vm345, %v344, %v341
  %s347 = scalar_lea.vmem %s0, 4294967261
  %s348 = smov 96
  %v349 = vld [vmem:[%s347] ss:$16 sm:%s348]
  %vm350 = vcmask 1046533
  %v351 = vsel %vm350, %v349, %v346
  %s352 = scalar_lea.vmem %s0, 70
  %v353 = vld [vmem:[%s352] sm:$0x80]
  %vm354 = vcmask 1047559
  %v355 = vsel %vm354, %v353, %v351
  %356 = vrot.lane.b32.xlu0 %v355, 32
  %v357 = vpop.permute.xlu0 %356
  %vm358 = vcmask 523520
  %s359 = scalar_lea.vmem %s1, 48
  %360 = vst.msk [vmem:[%s359] ss:$-26 sm:$0x3] %vm358, %v357
  %s361 = scalar_lea.vmem %s1, 21
  %362 = vst.msk [vmem:[%s361] sm:$0xfc] %vm358, %v357
  %s363 = scalar_lea.vmem %s0, 141
  %s364 = smov 3
  %v365 = vld [vmem:[%s363] ss:$-48 sm:%s364]
  %s366 = scalar_lea.vmem %s0, 77
  %s367 = smov 12
  %v368 = vld [vmem:[%s366] ss:$16 sm:%s367]
  %vm369 = vcmask 1043458
  %v370 = vsel %vm369, %v368, %v365
  %371 = vrot.lane.b32.xlu0 %v370, 32
  %v372 = vpop.permute.xlu0 %371
  %vm373 = vcmask 523520
  %s374 = scalar_lea.vmem %s1, 56
  %375 = vst.msk [vmem:[%s374] ss:$-27 sm:$0x3] %vm373, %v372
  %s376 = scalar_lea.vmem %s1, 28
  %377 = vst.msk [vmem:[%s376] sm:$0xc] %vm373, %v372

// kernel: inverted_residual_pallas.1
$region0: #{inverted_residual_pallas.1}
  #allocation0 [shape = 'u32[]', space=smem, size = 0x4, offset = 0x4, fixed_abs, tag = 'smem constant byte address 0x4 - core index']
  #allocation1 [shape = 'u32[72,128]{1,0:T(1,128)}', space=vmem, size = 0x9000, scoped, tag = 'internal scratch']
  %s0 = inlined_call_operand.vmem [shape: f32[2,16,128], index: 0, kind: input, shape index: {}]
  %s1 = inlined_call_operand.vmem [shape: f32[128,512], index: 1, kind: input, shape index: {}]
  %s2 = inlined_call_operand.vmem [shape: f32[1,512], index: 2, kind: input, shape index: {}]
  %s3 = inlined_call_operand.vmem [shape: f32[9,512], index: 3, kind: input, shape index: {}]
  %s4 = inlined_call_operand.vmem [shape: f32[1,512], index: 4, kind: input, shape index: {}]
  %s5 = inlined_call_operand.vmem [shape: f32[512,128], index: 5, kind: input, shape index: {}]
  %s6 = inlined_call_operand.vmem [shape: f32[1,128], index: 6, kind: input, shape index: {}]
  %s7 = inlined_call_operand.vmem [shape: f32[2,16,128], index: 7, kind: output, shape index: {}]
  %s8 = sld [smem:[#allocation0]]
  $region61: #{inverted_residual_pallas.1} parent=0
    _
  %s10 = ssub.s32 1, %s8
  %s11 = scalar_select 0, %s10, %s8
  loop: start=0, step=1, limit=4
  $region2: #{inverted_residual_pallas.1} parent=0 // loop_pre_header
    _
  $region3: #{inverted_residual_pallas.1} parent=0 // loop_header
    %s13 = sphi 0, %s17
    %p14 = scmp.ge.s32.totalorder %s13, 4
    %s23 = sphi 0, %s25
    %s26 = sphi 0, %s23
    %s27 = sphi 0, %s26
    %s43 = sphi 0, %s27
    %s47 = sphi 0, %s47
    %s49 = sphi 0, %s47
    %s50 = sphi 0, %s49
    %s64 = sphi 0, %s50
    %s68 = sphi 0, %s68
    %s70 = sphi 0, %s68
    %s71 = sphi 0, %s70
    %s85 = sphi 0, %s71
    %s89 = sphi 0, %s89
    %s91 = sphi 0, %s89
    %s92 = sphi 0, %s91
    %s106 = sphi 0, %s92
    %s110 = sphi 0, %s110
    %s112 = sphi 0, %s110
    %s113 = sphi 0, %s112
    %s127 = sphi 0, %s113
    %s131 = sphi 0, %s131
    %s133 = sphi 0, %s131
    %s134 = sphi 0, %s133
    %s148 = sphi 0, %s134
    %s152 = sphi 0, %s152
    %s154 = sphi 0, %s152
    %s155 = sphi 0, %s154
    %s169 = sphi 0, %s155
    %s175 = sphi 0, %s177
    %s178 = sphi 0, %s175
    %s179 = sphi 0, %s178
    %s195 = sphi 0, %s179
  $region4: #{inverted_residual_pallas.1} parent=0 // loop_header_branch
    %16 = sbr.rel (%p14) target = $region8
  $region5: #{inverted_residual_pallas.1} parent=0 // loop_body
    %s18 = ssub.s32 %s13, 1
    %s19 = ssub.s32 %s13, 2
    %s20 = sadd.s32 %s13, 1
    %s21 = ssub.s32 %s13, %s20
    %p22 = scmp.eq.s32.totalorder %s21, 0
    %s24 = sadd.s32 %s23, 1
    %s25 = scalar_select %p22, %s23, %s24
    %p28 = pneg %p22
    %p29 = scmp.eq.s32.totalorder %s13, 1
    %p30 = por %p28, %p29
    %p31 = scmp.ne.s32.totalorder %s23, %s26
    %p32 = scmp.eq.s32.totalorder %s13, 0
    %p33 = por %p31, %p32
    %p34 = scmp.ne.s32.totalorder %s23, %s26
    %p35 = scmp.eq.s32.totalorder %s18, 1
    %p36 = por %p34, %p35
    %p37 = scmp.ne.s32.totalorder %s26, %s27
    %p38 = scmp.eq.s32.totalorder %s18, 0
    %p39 = por %p37, %p38
    %p40 = scmp.ne.s32.totalorder %s26, %s27
    %p41 = scmp.eq.s32.totalorder %s19, 1
    %p42 = por %p40, %p41
    %p44 = scmp.ne.s32.totalorder %s27, %s43
    %p45 = scmp.eq.s32.totalorder %s19, 0
    %p46 = por %p44, %p45
    %s48 = sadd.s32 %s47, 1
    %p51 = scmp.eq.s32.totalorder %s13, 1
    %p52 = scmp.ne.s32.totalorder %s47, %s49
    %p53 = scmp.eq.s32.totalorder %s13, 0
    %p54 = por %p52, %p53
    %p55 = scmp.ne.s32.totalorder %s47, %s49
    %p56 = scmp.eq.s32.totalorder %s18, 1
    %p57 = por %p55, %p56
    %p58 = scmp.ne.s32.totalorder %s49, %s50
    %p59 = scmp.eq.s32.totalorder %s18, 0
    %p60 = por %p58, %p59
    %p61 = scmp.ne.s32.totalorder %s49, %s50
    %p62 = scmp.eq.s32.totalorder %s19, 1
    %p63 = por %p61, %p62
    %p65 = scmp.ne.s32.totalorder %s50, %s64
    %p66 = scmp.eq.s32.totalorder %s19, 0
    %p67 = por %p65, %p66
    %s69 = sadd.s32 %s68, 1
    %p72 = scmp.eq.s32.totalorder %s13, 1
    %p73 = scmp.ne.s32.totalorder %s68, %s70
    %p74 = scmp.eq.s32.totalorder %s13, 0
    %p75 = por %p73, %p74
    %p76 = scmp.ne.s32.totalorder %s68, %s70
    %p77 = scmp.eq.s32.totalorder %s18, 1
    %p78 = por %p76, %p77
    %p79 = scmp.ne.s32.totalorder %s70, %s71
    %p80 = scmp.eq.s32.totalorder %s18, 0
    %p81 = por %p79, %p80
    %p82 = scmp.ne.s32.totalorder %s70, %s71
    %p83 = scmp.eq.s32.totalorder %s19, 1
    %p84 = por %p82, %p83
    %p86 = scmp.ne.s32.totalorder %s71, %s85
    %p87 = scmp.eq.s32.totalorder %s19, 0
    %p88 = por %p86, %p87
    %s90 = sadd.s32 %s89, 1
    %p93 = scmp.eq.s32.totalorder %s13, 1
    %p94 = scmp.ne.s32.totalorder %s89, %s91
    %p95 = scmp.eq.s32.totalorder %s13, 0
    %p96 = por %p94, %p95
    %p97 = scmp.ne.s32.totalorder %s89, %s91
    %p98 = scmp.eq.s32.totalorder %s18, 1
    %p99 = por %p97, %p98
    %p100 = scmp.ne.s32.totalorder %s91, %s92
    %p101 = scmp.eq.s32.totalorder %s18, 0
    %p102 = por %p100, %p101
    %p103 = scmp.ne.s32.totalorder %s91, %s92
    %p104 = scmp.eq.s32.totalorder %s19, 1
    %p105 = por %p103, %p104
    %p107 = scmp.ne.s32.totalorder %s92, %s106
    %p108 = scmp.eq.s32.totalorder %s19, 0
    %p109 = por %p107, %p108
    %s111 = sadd.s32 %s110, 1
    %p114 = scmp.eq.s32.totalorder %s13, 1
    %p115 = scmp.ne.s32.totalorder %s110, %s112
    %p116 = scmp.eq.s32.totalorder %s13, 0
    %p117 = por %p115, %p116
    %p118 = scmp.ne.s32.totalorder %s110, %s112
    %p119 = scmp.eq.s32.totalorder %s18, 1
    %p120 = por %p118, %p119
    %p121 = scmp.ne.s32.totalorder %s112, %s113
    %p122 = scmp.eq.s32.totalorder %s18, 0
    %p123 = por %p121, %p122
    %p124 = scmp.ne.s32.totalorder %s112, %s113
    %p125 = scmp.eq.s32.totalorder %s19, 1
    %p126 = por %p124, %p125
    %p128 = scmp.ne.s32.totalorder %s113, %s127
    %p129 = scmp.eq.s32.totalorder %s19, 0
    %p130 = por %p128, %p129
    %s132 = sadd.s32 %s131, 1
    %p135 = scmp.eq.s32.totalorder %s13, 1
    %p136 = scmp.ne.s32.totalorder %s131, %s133
    %p137 = scmp.eq.s32.totalorder %s13, 0
    %p138 = por %p136, %p137
    %p139 = scmp.ne.s32.totalorder %s131, %s133
    %p140 = scmp.eq.s32.totalorder %s18, 1
    %p141 = por %p139, %p140
    %p142 = scmp.ne.s32.totalorder %s133, %s134
    %p143 = scmp.eq.s32.totalorder %s18, 0
    %p144 = por %p142, %p143
    %p145 = scmp.ne.s32.totalorder %s133, %s134
    %p146 = scmp.eq.s32.totalorder %s19, 1
    %p147 = por %p145, %p146
    %p149 = scmp.ne.s32.totalorder %s134, %s148
    %p150 = scmp.eq.s32.totalorder %s19, 0
    %p151 = por %p149, %p150
    %s153 = sadd.s32 %s152, 1
    %p156 = scmp.eq.s32.totalorder %s13, 1
    %p157 = scmp.ne.s32.totalorder %s152, %s154
    %p158 = scmp.eq.s32.totalorder %s13, 0
    %p159 = por %p157, %p158
    %p160 = scmp.ne.s32.totalorder %s152, %s154
    %p161 = scmp.eq.s32.totalorder %s18, 1
    %p162 = por %p160, %p161
    %p163 = scmp.ne.s32.totalorder %s154, %s155
    %p164 = scmp.eq.s32.totalorder %s18, 0
    %p165 = por %p163, %p164
    %p166 = scmp.ne.s32.totalorder %s154, %s155
    %p167 = scmp.eq.s32.totalorder %s19, 1
    %p168 = por %p166, %p167
    %p170 = scmp.ne.s32.totalorder %s155, %s169
    %p171 = scmp.eq.s32.totalorder %s19, 0
    %p172 = por %p170, %p171
    %s173 = ssub.s32 %s13, %s20
    %p174 = scmp.eq.s32.totalorder %s173, 0
    %s176 = sadd.s32 %s175, 1
    %s177 = scalar_select %p174, %s175, %s176
    %p180 = pneg %p174
    %p181 = scmp.eq.s32.totalorder %s13, 1
    %p182 = por %p180, %p181
    %p183 = scmp.ne.s32.totalorder %s175, %s178
    %p184 = scmp.eq.s32.totalorder %s13, 0
    %p185 = por %p183, %p184
    %p186 = scmp.ne.s32.totalorder %s175, %s178
    %p187 = scmp.eq.s32.totalorder %s18, 1
    %p188 = por %p186, %p187
    %p189 = scmp.ne.s32.totalorder %s178, %s179
    %p190 = scmp.eq.s32.totalorder %s18, 0
    %p191 = por %p189, %p190
    %p192 = scmp.ne.s32.totalorder %s178, %s179
    %p193 = scmp.eq.s32.totalorder %s19, 1
    %p194 = por %p192, %p193
    %p196 = scmp.ne.s32.totalorder %s179, %s195
    %p197 = scmp.eq.s32.totalorder %s19, 0
    %p198 = por %p196, %p197
    %p199 = scmp.le.s32.totalorder 1, %s13
    %p200 = scmp.lt.s32.totalorder %s13, 3
    %p201 = pnand %p199, %p200
    %p202 = pneg %p201
    // Predicated region
    $region9: #{inverted_residual_pallas.1} parent=5 // pred_check
      _
    $region10: #{inverted_residual_pallas.1} parent=5 // pred_check_branch
      %204 = sbr.rel (%p201) target = $region12
    $region11: #{inverted_residual_pallas.1} parent=5 // pred_region
      %s205 = ssub.s32 %s13, 1
      // Predicated region
      $region13: #{inverted_residual_pallas.1} parent=11 // pred_check
        %p206 = pneg %p60
      $region14: #{inverted_residual_pallas.1} parent=11 // pred_check_branch
        %208 = sbr.rel (%p206) target = $region16
      $region15: #{inverted_residual_pallas.1} parent=11 // pred_region
        _
      $region16: #{inverted_residual_pallas.1} parent=11 // pred_fallthru
        _
      // Predicated region
      $region17: #{inverted_residual_pallas.1} parent=11 // pred_check
        %p209 = pneg %p81
      $region18: #{inverted_residual_pallas.1} parent=11 // pred_check_branch
        %211 = sbr.rel (%p209) target = $region20
      $region19: #{inverted_residual_pallas.1} parent=11 // pred_region
        _
      $region20: #{inverted_residual_pallas.1} parent=11 // pred_fallthru
        _
      // Predicated region
      $region21: #{inverted_residual_pallas.1} parent=11 // pred_check
        %p212 = pneg %p102
      $region22: #{inverted_residual_pallas.1} parent=11 // pred_check_branch
        %214 = sbr.rel (%p212) target = $region24
      $region23: #{inverted_residual_pallas.1} parent=11 // pred_region
        _
      $region24: #{inverted_residual_pallas.1} parent=11 // pred_fallthru
        _
      // Predicated region
      $region25: #{inverted_residual_pallas.1} parent=11 // pred_check
        %p215 = pneg %p123
      $region26: #{inverted_residual_pallas.1} parent=11 // pred_check_branch
        %217 = sbr.rel (%p215) target = $region28
      $region27: #{inverted_residual_pallas.1} parent=11 // pred_region
        _
      $region28: #{inverted_residual_pallas.1} parent=11 // pred_fallthru
        _
      // Predicated region
      $region29: #{inverted_residual_pallas.1} parent=11 // pred_check
        %p218 = pneg %p144
      $region30: #{inverted_residual_pallas.1} parent=11 // pred_check_branch
        %220 = sbr.rel (%p218) target = $region32
      $region31: #{inverted_residual_pallas.1} parent=11 // pred_region
        _
      $region32: #{inverted_residual_pallas.1} parent=11 // pred_fallthru
        _
      // Predicated region
      $region33: #{inverted_residual_pallas.1} parent=11 // pred_check
        %p221 = pneg %p165
      $region34: #{inverted_residual_pallas.1} parent=11 // pred_check_branch
        %223 = sbr.rel (%p221) target = $region36
      $region35: #{inverted_residual_pallas.1} parent=11 // pred_region
        _
      $region36: #{inverted_residual_pallas.1} parent=11 // pred_fallthru
        _
    $region12: #{inverted_residual_pallas.1} parent=5 // pred_fallthru
      _
    %p224 = scmp.lt.s32.totalorder %s13, 2
    // Predicated region
    $region37: #{inverted_residual_pallas.1} parent=5 // pred_check
      %p225 = pneg %p224
    $region38: #{inverted_residual_pallas.1} parent=5 // pred_check_branch
      %227 = sbr.rel (%p225) target = $region40
    $region39: #{inverted_residual_pallas.1} parent=5 // pred_region
      // Predicated region
      $region41: #{inverted_residual_pallas.1} parent=39 // pred_check
        %p228 = pneg %p33
      $region42: #{inverted_residual_pallas.1} parent=39 // pred_check_branch
        %230 = sbr.rel (%p228) target = $region44
      $region43: #{inverted_residual_pallas.1} parent=39 // pred_region
        %p231 = scmp.lt.s32.totalorder %s13, 1
        %s232 = scalar_select %p231, %s13, 1
        %s233 = smul.addr %s232, 2
        %s234 = smul.addr %s233, 8
        %s235 = scalar_lea.vmem %s0, %s234
      $region44: #{inverted_residual_pallas.1} parent=39 // pred_fallthru
        _
    $region40: #{inverted_residual_pallas.1} parent=5 // pred_fallthru
      _
    %p236 = scmp.le.s32.totalorder 1, %s13
    %p237 = scmp.lt.s32.totalorder %s13, 3
    %p238 = pnand %p236, %p237
    %p239 = pneg %p238
    // Predicated region
    $region45: #{inverted_residual_pallas.1} parent=5 // pred_check
      _
    $region46: #{inverted_residual_pallas.1} parent=5 // pred_check_branch
      %241 = sbr.rel (%p238) target = $region48
    $region47: #{inverted_residual_pallas.1} parent=5 // pred_region
      %s242 = ssub.s32 %s13, 1
      %p243 = scmp.lt.s32.totalorder %s18, 1
      %s244 = scalar_select %p243, %s18, 1
      %s245 = smul.addr %s244, 2
      %s246 = smul.addr %s245, 8
      %s247 = scalar_lea.vmem %s0, %s246
      %p248 = pneg %p39
      %p249 = pneg %p36
      %p250 = pneg %p60
      %p251 = pneg %p57
      %p252 = pneg %p81
      %p253 = pneg %p78
      %p254 = pneg %p102
      %p255 = pneg %p99
      %p256 = pneg %p123
      %p257 = pneg %p120
      %p258 = pneg %p144
      %p259 = pneg %p141
      %p260 = pneg %p165
      %p261 = pneg %p162
      %p262 = pneg %p191
      %p263 = pneg %p188
      %p264 = scmp.lt.s32.totalorder %s18, 1
      %s265 = scalar_select %p264, %s18, 1
      %s266 = smul.addr %s265, 2
      %s267 = smul.addr %s266, 8
      %s268 = scalar_lea.vmem %s7, %s267
      %p269 = scmp.lt.s32.totalorder %s18, 1
      %s270 = scalar_select %p269, %s18, 1
      %s271 = smul.addr %s270, 2
      %s272 = smul.addr %s271, 8
      %s273 = scalar_lea.vmem %s0, %s272
      %p274 = scmp.lt.s32.totalorder %s18, 1
      %s275 = scalar_select %p274, %s18, 1
      %s276 = smul.addr %s275, 2
      %s277 = smul.addr %s276, 8
      %s278 = scalar_lea.vmem %s7, %s277
      %v279 = vld [vmem:[%s273] sm:$0xff]
      %v280 = vld [vmem:[%s273 + $0x8] sm:$0xff]
      %v281 = vld [vmem:[%s1] sm:$0xff]
      %v282 = vld [vmem:[%s1 + $0x8] sm:$0xff]
      %v283 = vld [vmem:[%s1 + $0x10] sm:$0xff]
      %v284 = vld [vmem:[%s1 + $0x18] sm:$0xff]
      %v285 = vld [vmem:[%s1 + $0x20] sm:$0xff]
      %v286 = vld [vmem:[%s1 + $0x28] sm:$0xff]
      %v287 = vld [vmem:[%s1 + $0x30] sm:$0xff]
      %v288 = vld [vmem:[%s1 + $0x38] sm:$0xff]
      %v289 = vld [vmem:[%s1 + $0x40] sm:$0xff]
      %v290 = vld [vmem:[%s1 + $0x48] sm:$0xff]
      %v291 = vld [vmem:[%s1 + $0x50] sm:$0xff]
      %v292 = vld [vmem:[%s1 + $0x58] sm:$0xff]
      %v293 = vld [vmem:[%s1 + $0x60] sm:$0xff]
      %v294 = vld [vmem:[%s1 + $0x68] sm:$0xff]
      %v295 = vld [vmem:[%s1 + $0x70] sm:$0xff]
      %v296 = vld [vmem:[%s1 + $0x78] sm:$0xff]
      %v297 = vld [vmem:[%s1 + $0x80] sm:$0xff]
      %v298 = vld [vmem:[%s1 + $0x88] sm:$0xff]
      %v299 = vld [vmem:[%s1 + $0x90] sm:$0xff]
      %v300 = vld [vmem:[%s1 + $0x98] sm:$0xff]
      %v301 = vld [vmem:[%s1 + $0xa0] sm:$0xff]
      %v302 = vld [vmem:[%s1 + $0xa8] sm:$0xff]
      %v303 = vld [vmem:[%s1 + $0xb0] sm:$0xff]
      %v304 = vld [vmem:[%s1 + $0xb8] sm:$0xff]
      %v305 = vld [vmem:[%s1 + $0xc0] sm:$0xff]
      %v306 = vld [vmem:[%s1 + $0xc8] sm:$0xff]
      %v307 = vld [vmem:[%s1 + $0xd0] sm:$0xff]
      %v308 = vld [vmem:[%s1 + $0xd8] sm:$0xff]
      %v309 = vld [vmem:[%s1 + $0xe0] sm:$0xff]
      %v310 = vld [vmem:[%s1 + $0xe8] sm:$0xff]
      %v311 = vld [vmem:[%s1 + $0xf0] sm:$0xff]
      %v312 = vld [vmem:[%s1 + $0xf8] sm:$0xff]
      %v313 = vld [vmem:[%s1 + $0x100] sm:$0xff]
      %v314 = vld [vmem:[%s1 + $0x108] sm:$0xff]
      %v315 = vld [vmem:[%s1 + $0x110] sm:$0xff]
      %v316 = vld [vmem:[%s1 + $0x118] sm:$0xff]
      %v317 = vld [vmem:[%s1 + $0x120] sm:$0xff]
      %v318 = vld [vmem:[%s1 + $0x128] sm:$0xff]
      %v319 = vld [vmem:[%s1 + $0x130] sm:$0xff]
      %v320 = vld [vmem:[%s1 + $0x138] sm:$0xff]
      %v321 = vld [vmem:[%s1 + $0x140] sm:$0xff]
      %v322 = vld [vmem:[%s1 + $0x148] sm:$0xff]
      %v323 = vld [vmem:[%s1 + $0x150] sm:$0xff]
      %v324 = vld [vmem:[%s1 + $0x158] sm:$0xff]
      %v325 = vld [vmem:[%s1 + $0x160] sm:$0xff]
      %v326 = vld [vmem:[%s1 + $0x168] sm:$0xff]
      %v327 = vld [vmem:[%s1 + $0x170] sm:$0xff]
      %v328 = vld [vmem:[%s1 + $0x178] sm:$0xff]
      %v329 = vld [vmem:[%s1 + $0x180] sm:$0xff]
      %v330 = vld [vmem:[%s1 + $0x188] sm:$0xff]
      %v331 = vld [vmem:[%s1 + $0x190] sm:$0xff]
      %v332 = vld [vmem:[%s1 + $0x198] sm:$0xff]
      %v333 = vld [vmem:[%s1 + $0x1a0] sm:$0xff]
      %v334 = vld [vmem:[%s1 + $0x1a8] sm:$0xff]
      %v335 = vld [vmem:[%s1 + $0x1b0] sm:$0xff]
      %v336 = vld [vmem:[%s1 + $0x1b8] sm:$0xff]
      %v337 = vld [vmem:[%s1 + $0x1c0] sm:$0xff]
      %v338 = vld [vmem:[%s1 + $0x1c8] sm:$0xff]
      %v339 = vld [vmem:[%s1 + $0x1d0] sm:$0xff]
      %v340 = vld [vmem:[%s1 + $0x1d8] sm:$0xff]
      %v341 = vld [vmem:[%s1 + $0x1e0] sm:$0xff]
      %v342 = vld [vmem:[%s1 + $0x1e8] sm:$0xff]
      %v343 = vld [vmem:[%s1 + $0x1f0] sm:$0xff]
      %v344 = vld [vmem:[%s1 + $0x1f8] sm:$0xff]
      %v345 = vld [vmem:[%s2] sm:$0xf]
      %v347 = vperm.slane %v345, 0
      %v348 = vperm.slane %v345, 1
      %v349 = vperm.slane %v345, 2
      %v350 = vperm.slane %v345, 3
      %355 = vmatpush.msra.mxu0 %v341
      %356 = vmatpush.msra.mxu0 %v337
      %357 = vmatpush.msra.mxu0 %v333
      %358 = vmatpush.msra.mxu0 %v329
      %359 = vmatpush.msra.mxu0 %v325
      %360 = vmatpush.msra.mxu0 %v321
      %361 = vmatpush.msra.mxu0 %v317
      %362 = vmatpush.msra.mxu0 %v313
      %363 = vmatpush.msra.mxu0 %v309
      %364 = vmatpush.msra.mxu0 %v305
      %365 = vmatpush.msra.mxu0 %v301
      %366 = vmatpush.msra.mxu0 %v297
      %367 = vmatpush.msra.mxu0 %v293
      %368 = vmatpush.msra.mxu0 %v289
      %369 = vmatpush.msra.mxu0 %v285
      %370 = vmatpush.msra.mxu0 %v281
      %371 = vmatmul.f32.gmra.mxu0 %v279
      %v372 = vpop.f32.mrf.mxu0
      %v373 = vadd.f32 %v347, %v372
      %374 = vmatmul.f32.gmra.mxu0 %v280
      %v375 = vpop.f32.mrf.mxu0
      %v376 = vadd.f32 %v347, %v375
      %377 = vdwg.mxu0
      %378 = vmatpush.msra.mxu0 %v342
      %379 = vmatpush.msra.mxu0 %v338
      %380 = vmatpush.msra.mxu0 %v334
      %381 = vmatpush.msra.mxu0 %v330
      %382 = vmatpush.msra.mxu0 %v326
      %383 = vmatpush.msra.mxu0 %v322
      %384 = vmatpush.msra.mxu0 %v318
      %385 = vmatpush.msra.mxu0 %v314
      %386 = vmatpush.msra.mxu0 %v310
      %387 = vmatpush.msra.mxu0 %v306
      %388 = vmatpush.msra.mxu0 %v302
      %389 = vmatpush.msra.mxu0 %v298
      %390 = vmatpush.msra.mxu0 %v294
      %391 = vmatpush.msra.mxu0 %v290
      %392 = vmatpush.msra.mxu0 %v286
      %393 = vmatpush.msra.mxu0 %v282
      %394 = vmatmul.f32.gmra.mxu0 %v279
      %v395 = vpop.f32.mrf.mxu0
      %v396 = vadd.f32 %v348, %v395
      %397 = vmatmul.f32.gmra.mxu0 %v280
      %v398 = vpop.f32.mrf.mxu0
      %v399 = vadd.f32 %v348, %v398
      %400 = vdwg.mxu0
      %401 = vmatpush.msra.mxu0 %v343
      %402 = vmatpush.msra.mxu0 %v339
      %403 = vmatpush.msra.mxu0 %v335
      %404 = vmatpush.msra.mxu0 %v331
      %405 = vmatpush.msra.mxu0 %v327
      %406 = vmatpush.msra.mxu0 %v323
      %407 = vmatpush.msra.mxu0 %v319
      %408 = vmatpush.msra.mxu0 %v315
      %409 = vmatpush.msra.mxu0 %v311
      %410 = vmatpush.msra.mxu0 %v307
      %411 = vmatpush.msra.mxu0 %v303
      %412 = vmatpush.msra.mxu0 %v299
      %413 = vmatpush.msra.mxu0 %v295
      %414 = vmatpush.msra.mxu0 %v291
      %415 = vmatpush.msra.mxu0 %v287
      %416 = vmatpush.msra.mxu0 %v283
      %417 = vmatmul.f32.gmra.mxu0 %v279
      %v418 = vpop.f32.mrf.mxu0
      %v419 = vadd.f32 %v349, %v418
      %420 = vmatmul.f32.gmra.mxu0 %v280
      %v421 = vpop.f32.mrf.mxu0
      %v422 = vadd.f32 %v349, %v421
      %423 = vdwg.mxu0
      %424 = vmatpush.msra.mxu0 %v344
      %425 = vmatpush.msra.mxu0 %v340
      %426 = vmatpush.msra.mxu0 %v336
      %427 = vmatpush.msra.mxu0 %v332
      %428 = vmatpush.msra.mxu0 %v328
      %429 = vmatpush.msra.mxu0 %v324
      %430 = vmatpush.msra.mxu0 %v320
      %431 = vmatpush.msra.mxu0 %v316
      %432 = vmatpush.msra.mxu0 %v312
      %433 = vmatpush.msra.mxu0 %v308
      %434 = vmatpush.msra.mxu0 %v304
      %435 = vmatpush.msra.mxu0 %v300
      %436 = vmatpush.msra.mxu0 %v296
      %437 = vmatpush.msra.mxu0 %v292
      %438 = vmatpush.msra.mxu0 %v288
      %439 = vmatpush.msra.mxu0 %v284
      %440 = vmatmul.f32.gmra.mxu0 %v279
      %v441 = vpop.f32.mrf.mxu0
      %v442 = vadd.f32 %v350, %v441
      %443 = vmatmul.f32.gmra.mxu0 %v280
      %v444 = vpop.f32.mrf.mxu0
      %v445 = vadd.f32 %v350, %v444
      %446 = vdwg.mxu0
      %v447 = vmax.f32 %v373, 0.0
      %v448 = vmax.f32 %v396, 0.0
      %v449 = vmax.f32 %v419, 0.0
      %v450 = vmax.f32 %v442, 0.0
      %v451 = vmax.f32 %v376, 0.0
      %v452 = vmax.f32 %v399, 0.0
      %v453 = vmax.f32 %v422, 0.0
      %v454 = vmax.f32 %v445, 0.0
      %v455 = vmin.f32 %v447, 6.0
      %v456 = vmin.f32 %v448, 6.0
      %v457 = vmin.f32 %v449, 6.0
      %v458 = vmin.f32 %v450, 6.0
      %v459 = vmin.f32 %v451, 6.0
      %v460 = vmin.f32 %v452, 6.0
      %v461 = vmin.f32 %v453, 6.0
      %v462 = vmin.f32 %v454, 6.0
      %v463 = vlaneseq
      %v464 = vand.u32 %v463, 127
      %v465 = vadd.s32 %v464, 128
      %v466 = vadd.s32 %v464, 256
      %v467 = vadd.s32 %v464, 384
      %v468 = vlaneseq
      %v469 = vshrl.u32 %v468, 7
      %v470 = vadd.s32 %v469, 8
      %v471 = vrot.slane %v455, 7
      %v472 = vrot.slane %v456, 7
      %v473 = vrot.slane %v457, 7
      %v474 = vrot.slane %v458, 7
      %v475 = vrot.slane %v459, 7
      %v476 = vrot.slane %v460, 7
      %v477 = vrot.slane %v461, 7
      %v478 = vrot.slane %v462, 7
      %vm479 = vcmp.lt.s32.totalorder %v469, 1
      %v480 = vsel %vm479, %v471, %v475
      %v481 = vsel %vm479, %v472, %v476
      %v482 = vsel %vm479, %v473, %v477
      %v483 = vsel %vm479, %v474, %v478
      %v484 = vsel %vm479, %v475, %v471
      %v485 = vsel %vm479, %v476, %v472
      %v486 = vsel %vm479, %v477, %v473
      %v487 = vsel %vm479, %v478, %v474
      %vm488 = vcmp.eq.s32.totalorder %v469, 0
      %vm489 = vcmp.eq.s32.totalorder %v470, 0
      %vm490 = vmxor %vm488, 1
      %vm491 = vmxor %vm489, 1
      %v492 = vsel %vm490, 1, 0
      %v493 = vsel %vm491, 1, 0
      %vm494 = vcmp.eq.s32.totalorder %v492, 1
      %vm495 = vcmp.eq.s32.totalorder %v493, 1
      %v496 = vsel %vm494, %v484, 0.0
      %v497 = vsel %vm494, %v485, 0.0
      %v498 = vsel %vm494, %v486, 0.0
      %v499 = vsel %vm494, %v487, 0.0
      %v500 = vsel %vm495, %v480, 0.0
      %v501 = vsel %vm495, %v481, 0.0
      %v502 = vsel %vm495, %v482, 0.0
      %v503 = vsel %vm495, %v483, 0.0
      %504 = vrot.lane.b32.xlu0 %v496, 32
      %v505 = vpop.permute.xlu0 %504
      %506 = vrot.lane.b32.xlu0 %v500, 32
      %v507 = vpop.permute.xlu0 %506
      %508 = vrot.lane.b32.xlu0 %v497, 32
      %v509 = vpop.permute.xlu0 %508
      %510 = vrot.lane.b32.xlu0 %v501, 32
      %v511 = vpop.permute.xlu0 %510
      %512 = vrot.lane.b32.xlu0 %v498, 32
      %v513 = vpop.permute.xlu0 %512
      %514 = vrot.lane.b32.xlu0 %v502, 32
      %v515 = vpop.permute.xlu0 %514
      %516 = vrot.lane.b32.xlu0 %v499, 32
      %v517 = vpop.permute.xlu0 %516
      %518 = vrot.lane.b32.xlu0 %v503, 32
      %v519 = vpop.permute.xlu0 %518
      %vm520 = vcmp.lt.s32.totalorder %v464, 32
      %v521 = vsel %vm520, %v513, %v517
      %v522 = vsel %vm520, %v515, %v519
      %v523 = vsel %vm520, %v509, %v513
      %v524 = vsel %vm520, %v511, %v515
      %v525 = vsel %vm520, %v505, %v509
      %v526 = vsel %vm520, %v507, %v511
      %v527 = vsel %vm520, %v517, %v505
      %v528 = vsel %vm520, %v519, %v507
      %vm529 = vcmp.ge.s32.totalorder %v464, 32
      %vm530 = vcmp.ge.s32.totalorder %v465, 32
      %vm531 = vcmp.ge.s32.totalorder %v466, 32
      %vm532 = vcmp.ge.s32.totalorder %v467, 32
      %v533 = vsel %vm529, 1, 0
      %v534 = vsel %vm530, 1, 0
      %v535 = vsel %vm531, 1, 0
      %v536 = vsel %vm532, 1, 0
      %vm537 = vcmp.eq.s32.totalorder %v533, 1
      %vm538 = vcmp.eq.s32.totalorder %v534, 1
      %vm539 = vcmp.eq.s32.totalorder %v535, 1
      %vm540 = vcmp.eq.s32.totalorder %v536, 1
      %v541 = vsel %vm537, %v527, 0.0
      %v542 = vsel %vm538, %v525, 0.0
      %v543 = vsel %vm539, %v523, 0.0
      %v544 = vsel %vm540, %v521, 0.0
      %v545 = vsel %vm537, %v528, 0.0
      %v546 = vsel %vm538, %v526, 0.0
      %v547 = vsel %vm539, %v524, 0.0
      %v548 = vsel %vm540, %v522, 0.0
      %v549 = vld [vmem:[%s3] ss:$8 sm:$0xf]
      %v551 = vperm.slane %v549, 0
      %v552 = vperm.slane %v549, 1
      %v553 = vperm.slane %v549, 2
      %v554 = vperm.slane %v549, 3
      %v559 = vmul.f32 %v541, %v551
      %v560 = vmul.f32 %v542, %v552
      %v561 = vmul.f32 %v543, %v553
      %v562 = vmul.f32 %v544, %v554
      %v563 = vmul.f32 %v545, %v551
      %v564 = vmul.f32 %v546, %v552
      %v565 = vmul.f32 %v547, %v553
      %v566 = vmul.f32 %v548, %v554
      %v567 = vadd.f32 %v559, 0.0
      %v568 = vadd.f32 %v560, 0.0
      %v569 = vadd.f32 %v561, 0.0
      %v570 = vadd.f32 %v562, 0.0
      %v571 = vadd.f32 %v563, 0.0
      %v572 = vadd.f32 %v564, 0.0
      %v573 = vadd.f32 %v565, 0.0
      %v574 = vadd.f32 %v566, 0.0
      %s575 = scalar_lea.vmem %s3, 1
      %v576 = vld [vmem:[%s575] ss:$8 sm:$0xf]
      %v578 = vperm.slane %v576, 0
      %v579 = vperm.slane %v576, 1
      %v580 = vperm.slane %v576, 2
      %v581 = vperm.slane %v576, 3
      %v586 = vmul.f32 %v496, %v578
      %v587 = vmul.f32 %v497, %v579
      %v588 = vmul.f32 %v498, %v580
      %v589 = vmul.f32 %v499, %v581
      %v590 = vmul.f32 %v500, %v578
      %v591 = vmul.f32 %v501, %v579
      %v592 = vmul.f32 %v502, %v580
      %v593 = vmul.f32 %v503, %v581
      %v594 = vadd.f32 %v567, %v586
      %v595 = vadd.f32 %v568, %v587
      %v596 = vadd.f32 %v569, %v588
      %v597 = vadd.f32 %v570, %v589
      %v598 = vadd.f32 %v571, %v590
      %v599 = vadd.f32 %v572, %v591
      %v600 = vadd.f32 %v573, %v592
      %v601 = vadd.f32 %v574, %v593
      %602 = vrot.lane.b32.xlu0 %v496, 96
      %v603 = vpop.permute.xlu0 %602
      %604 = vrot.lane.b32.xlu0 %v500, 96
      %v605 = vpop.permute.xlu0 %604
      %606 = vrot.lane.b32.xlu0 %v497, 96
      %v607 = vpop.permute.xlu0 %606
      %608 = vrot.lane.b32.xlu0 %v501, 96
      %v609 = vpop.permute.xlu0 %608
      %610 = vrot.lane.b32.xlu0 %v498, 96
      %v611 = vpop.permute.xlu0 %610
      %612 = vrot.lane.b32.xlu0 %v502, 96
      %v613 = vpop.permute.xlu0 %612
      %614 = vrot.lane.b32.xlu0 %v499, 96
      %v615 = vpop.permute.xlu0 %614
      %616 = vrot.lane.b32.xlu0 %v503, 96
      %v617 = vpop.permute.xlu0 %616
      %vm618 = vcmp.lt.s32.totalorder %v464, 96
      %v619 = vsel %vm618, %v611, %v615
      %v620 = vsel %vm618, %v613, %v617
      %v621 = vsel %vm618, %v607, %v611
      %v622 = vsel %vm618, %v609, %v613
      %v623 = vsel %vm618, %v603, %v607
      %v624 = vsel %vm618, %v605, %v609
      %v625 = vsel %vm618, %v615, %v603
      %v626 = vsel %vm618, %v617, %v605
      %vm627 = vcmp.lt.s32.totalorder %v464, 480
      %vm628 = vcmp.lt.s32.totalorder %v465, 480
      %vm629 = vcmp.lt.s32.totalorder %v466, 480
      %vm630 = vcmp.lt.s32.totalorder %v467, 480
      %v631 = vsel %vm627, 1, 0
      %v632 = vsel %vm628, 1, 0
      %v633 = vsel %vm629, 1, 0
      %v634 = vsel %vm630, 1, 0
      %vm635 = vcmp.eq.s32.totalorder %v631, 1
      %vm636 = vcmp.eq.s32.totalorder %v632, 1
      %vm637 = vcmp.eq.s32.totalorder %v633, 1
      %vm638 = vcmp.eq.s32.totalorder %v634, 1
      %v639 = vsel %vm635, %v623, 0.0
      %v640 = vsel %vm636, %v621, 0.0
      %v641 = vsel %vm637, %v619, 0.0
      %v642 = vsel %vm638, %v625, 0.0
      %v643 = vsel %vm635, %v624, 0.0
      %v644 = vsel %vm636, %v622, 0.0
      %v645 = vsel %vm637, %v620, 0.0
      %v646 = vsel %vm638, %v626, 0.0
      %s647 = scalar_lea.vmem %s3, 2
      %v648 = vld [vmem:[%s647] ss:$8 sm:$0xf]
      %v650 = vperm.slane %v648, 0
      %v651 = vperm.slane %v648, 1
      %v652 = vperm.slane %v648, 2
      %v653 = vperm.slane %v648, 3
      %v658 = vmul.f32 %v639, %v650
      %v659 = vmul.f32 %v640, %v651
      %v660 = vmul.f32 %v641, %v652
      %v661 = vmul.f32 %v642, %v653
      %v662 = vmul.f32 %v643, %v650
      %v663 = vmul.f32 %v644, %v651
      %v664 = vmul.f32 %v645, %v652
      %v665 = vmul.f32 %v646, %v653
      %v666 = vadd.f32 %v594, %v658
      %v667 = vadd.f32 %v595, %v659
      %v668 = vadd.f32 %v596, %v660
      %v669 = vadd.f32 %v597, %v661
      %v670 = vadd.f32 %v598, %v662
      %v671 = vadd.f32 %v599, %v663
      %v672 = vadd.f32 %v600, %v664
      %v673 = vadd.f32 %v601, %v665
      %674 = vrot.lane.b32.xlu0 %v455, 32
      %v675 = vpop.permute.xlu0 %674
      %676 = vrot.lane.b32.xlu0 %v459, 32
      %v677 = vpop.permute.xlu0 %676
      %678 = vrot.lane.b32.xlu0 %v456, 32
      %v679 = vpop.permute.xlu0 %678
      %680 = vrot.lane.b32.xlu0 %v460, 32
      %v681 = vpop.permute.xlu0 %680
      %682 = vrot.lane.b32.xlu0 %v457, 32
      %v683 = vpop.permute.xlu0 %682
      %684 = vrot.lane.b32.xlu0 %v461, 32
      %v685 = vpop.permute.xlu0 %684
      %686 = vrot.lane.b32.xlu0 %v458, 32
      %v687 = vpop.permute.xlu0 %686
      %688 = vrot.lane.b32.xlu0 %v462, 32
      %v689 = vpop.permute.xlu0 %688
      %v690 = vsel %vm520, %v683, %v687
      %v691 = vsel %vm520, %v685, %v689
      %v692 = vsel %vm520, %v679, %v683
      %v693 = vsel %vm520, %v681, %v685
      %v694 = vsel %vm520, %v675, %v679
      %v695 = vsel %vm520, %v677, %v681
      %v696 = vsel %vm520, %v687, %v675
      %v697 = vsel %vm520, %v689, %v677
      %v698 = vsel %vm537, %v696, 0.0
      %v699 = vsel %vm538, %v694, 0.0
      %v700 = vsel %vm539, %v692, 0.0
      %v701 = vsel %vm540, %v690, 0.0
      %v702 = vsel %vm537, %v697, 0.0
      %v703 = vsel %vm538, %v695, 0.0
      %v704 = vsel %vm539, %v693, 0.0
      %v705 = vsel %vm540, %v691, 0.0
      %s706 = scalar_lea.vmem %s3, 3
      %v707 = vld [vmem:[%s706] ss:$8 sm:$0xf]
      %v709 = vperm.slane %v707, 0
      %v710 = vperm.slane %v707, 1
      %v711 = vperm.slane %v707, 2
      %v712 = vperm.slane %v707, 3
      %v717 = vmul.f32 %v698, %v709
      %v718 = vmul.f32 %v699, %v710
      %v719 = vmul.f32 %v700, %v711
      %v720 = vmul.f32 %v701, %v712
      %v721 = vmul.f32 %v702, %v709
      %v722 = vmul.f32 %v703, %v710
      %v723 = vmul.f32 %v704, %v711
      %v724 = vmul.f32 %v705, %v712
      %v725 = vadd.f32 %v666, %v717
      %v726 = vadd.f32 %v667, %v718
      %v727 = vadd.f32 %v668, %v719
      %v728 = vadd.f32 %v669, %v720
      %v729 = vadd.f32 %v670, %v721
      %v730 = vadd.f32 %v671, %v722
      %v731 = vadd.f32 %v672, %v723
      %v732 = vadd.f32 %v673, %v724
      %s733 = scalar_lea.vmem %s3, 4
      %v734 = vld [vmem:[%s733] ss:$8 sm:$0xf]
      %v736 = vperm.slane %v734, 0
      %v737 = vperm.slane %v734, 1
      %v738 = vperm.slane %v734, 2
      %v739 = vperm.slane %v734, 3
      %v744 = vmul.f32 %v455, %v736
      %v745 = vmul.f32 %v456, %v737
      %v746 = vmul.f32 %v457, %v738
      %v747 = vmul.f32 %v458, %v739
      %v748 = vmul.f32 %v459, %v736
      %v749 = vmul.f32 %v460, %v737
      %v750 = vmul.f32 %v461, %v738
      %v751 = vmul.f32 %v462, %v739
      %v752 = vadd.f32 %v725, %v744
      %v753 = vadd.f32 %v726, %v745
      %v754 = vadd.f32 %v727, %v746
      %v755 = vadd.f32 %v728, %v747
      %v756 = vadd.f32 %v729, %v748
      %v757 = vadd.f32 %v730, %v749
      %v758 = vadd.f32 %v731, %v750
      %v759 = vadd.f32 %v732, %v751
      %760 = vrot.lane.b32.xlu0 %v455, 96
      %v761 = vpop.permute.xlu0 %760
      %762 = vrot.lane.b32.xlu0 %v459, 96
      %v763 = vpop.permute.xlu0 %762
      %764 = vrot.lane.b32.xlu0 %v456, 96
      %v765 = vpop.permute.xlu0 %764
      %766 = vrot.lane.b32.xlu0 %v460, 96
      %v767 = vpop.permute.xlu0 %766
      %768 = vrot.lane.b32.xlu0 %v457, 96
      %v769 = vpop.permute.xlu0 %768
      %770 = vrot.lane.b32.xlu0 %v461, 96
      %v771 = vpop.permute.xlu0 %770
      %772 = vrot.lane.b32.xlu0 %v458, 96
      %v773 = vpop.permute.xlu0 %772
      %774 = vrot.lane.b32.xlu0 %v462, 96
      %v775 = vpop.permute.xlu0 %774
      %v776 = vsel %vm618, %v769, %v773
      %v777 = vsel %vm618, %v771, %v775
      %v778 = vsel %vm618, %v765, %v769
      %v779 = vsel %vm618, %v767, %v771
      %v780 = vsel %vm618, %v761, %v765
      %v781 = vsel %vm618, %v763, %v767
      %v782 = vsel %vm618, %v773, %v761
      %v783 = vsel %vm618, %v775, %v763
      %v784 = vsel %vm635, %v780, 0.0
      %v785 = vsel %vm636, %v778, 0.0
      %v786 = vsel %vm637, %v776, 0.0
      %v787 = vsel %vm638, %v782, 0.0
      %v788 = vsel %vm635, %v781, 0.0
      %v789 = vsel %vm636, %v779, 0.0
      %v790 = vsel %vm637, %v777, 0.0
      %v791 = vsel %vm638, %v783, 0.0
      %s792 = scalar_lea.vmem %s3, 5
      %v793 = vld [vmem:[%s792] ss:$8 sm:$0xf]
      %v795 = vperm.slane %v793, 0
      %v796 = vperm.slane %v793, 1
      %v797 = vperm.slane %v793, 2
      %v798 = vperm.slane %v793, 3
      %v803 = vmul.f32 %v784, %v795
      %v804 = vmul.f32 %v785, %v796
      %v805 = vmul.f32 %v786, %v797
      %v806 = vmul.f32 %v787, %v798
      %v807 = vmul.f32 %v788, %v795
      %v808 = vmul.f32 %v789, %v796
      %v809 = vmul.f32 %v790, %v797
      %v810 = vmul.f32 %v791, %v798
      %v811 = vadd.f32 %v752, %v803
      %v812 = vadd.f32 %v753, %v804
      %v813 = vadd.f32 %v754, %v805
      %v814 = vadd.f32 %v755, %v806
      %v815 = vadd.f32 %v756, %v807
      %v816 = vadd.f32 %v757, %v808
      %v817 = vadd.f32 %v758, %v809
      %v818 = vadd.f32 %v759, %v810
      %v819 = vrot.slane %v455, 1
      %v820 = vrot.slane %v456, 1
      %v821 = vrot.slane %v457, 1
      %v822 = vrot.slane %v458, 1
      %v823 = vrot.slane %v459, 1
      %v824 = vrot.slane %v460, 1
      %v825 = vrot.slane %v461, 1
      %v826 = vrot.slane %v462, 1
      %vm827 = vcmp.lt.s32.totalorder %v469, 7
      %v828 = vsel %vm827, %v819, %v823
      %v829 = vsel %vm827, %v820, %v824
      %v830 = vsel %vm827, %v821, %v825
      %v831 = vsel %vm827, %v822, %v826
      %v832 = vsel %vm827, %v823, %v819
      %v833 = vsel %vm827, %v824, %v820
      %v834 = vsel %vm827, %v825, %v821
      %v835 = vsel %vm827, %v826, %v822
      %vm836 = vcmp.eq.s32.totalorder %v469, 15
      %vm837 = vcmp.eq.s32.totalorder %v470, 15
      %vm838 = vmxor %vm836, 1
      %vm839 = vmxor %vm837, 1
      %v840 = vsel %vm838, 1, 0
      %v841 = vsel %vm839, 1, 0
      %vm842 = vcmp.eq.s32.totalorder %v840, 1
      %vm843 = vcmp.eq.s32.totalorder %v841, 1
      %v844 = vsel %vm842, %v828, 0.0
      %v845 = vsel %vm842, %v829, 0.0
      %v846 = vsel %vm842, %v830, 0.0
      %v847 = vsel %vm842, %v831, 0.0
      %v848 = vsel %vm843, %v832, 0.0
      %v849 = vsel %vm843, %v833, 0.0
      %v850 = vsel %vm843, %v834, 0.0
      %v851 = vsel %vm843, %v835, 0.0
      %852 = vrot.lane.b32.xlu0 %v844, 32
      %v853 = vpop.permute.xlu0 %852
      %854 = vrot.lane.b32.xlu0 %v848, 32
      %v855 = vpop.permute.xlu0 %854
      %856 = vrot.lane.b32.xlu0 %v845, 32
      %v857 = vpop.permute.xlu0 %856
      %858 = vrot.lane.b32.xlu0 %v849, 32
      %v859 = vpop.permute.xlu0 %858
      %860 = vrot.lane.b32.xlu0 %v846, 32
      %v861 = vpop.permute.xlu0 %860
      %862 = vrot.lane.b32.xlu0 %v850, 32
      %v863 = vpop.permute.xlu0 %862
      %864 = vrot.lane.b32.xlu0 %v847, 32
      %v865 = vpop.permute.xlu0 %864
      %866 = vrot.lane.b32.xlu0 %v851, 32
      %v867 = vpop.permute.xlu0 %866
      %v868 = vsel %vm520, %v861, %v865
      %v869 = vsel %vm520, %v863, %v867
      %v870 = vsel %vm520, %v857, %v861
      %v871 = vsel %vm520, %v859, %v863
      %v872 = vsel %vm520, %v853, %v857
      %v873 = vsel %vm520, %v855, %v859
      %v874 = vsel %vm520, %v865, %v853
      %v875 = vsel %vm520, %v867, %v855
      %v876 = vsel %vm537, %v874, 0.0
      %v877 = vsel %vm538, %v872, 0.0
      %v878 = vsel %vm539, %v870, 0.0
      %v879 = vsel %vm540, %v868, 0.0
      %v880 = vsel %vm537, %v875, 0.0
      %v881 = vsel %vm538, %v873, 0.0
      %v882 = vsel %vm539, %v871, 0.0
      %v883 = vsel %vm540, %v869, 0.0
      %s884 = scalar_lea.vmem %s3, 6
      %v885 = vld [vmem:[%s884] ss:$8 sm:$0xf]
      %v887 = vperm.slane %v885, 0
      %v888 = vperm.slane %v885, 1
      %v889 = vperm.slane %v885, 2
      %v890 = vperm.slane %v885, 3
      %v895 = vmul.f32 %v876, %v887
      %v896 = vmul.f32 %v877, %v888
      %v897 = vmul.f32 %v878, %v889
      %v898 = vmul.f32 %v879, %v890
      %v899 = vmul.f32 %v880, %v887
      %v900 = vmul.f32 %v881, %v888
      %v901 = vmul.f32 %v882, %v889
      %v902 = vmul.f32 %v883, %v890
      %v903 = vadd.f32 %v811, %v895
      %v904 = vadd.f32 %v812, %v896
      %v905 = vadd.f32 %v813, %v897
      %v906 = vadd.f32 %v814, %v898
      %v907 = vadd.f32 %v815, %v899
      %v908 = vadd.f32 %v816, %v900
      %v909 = vadd.f32 %v817, %v901
      %v910 = vadd.f32 %v818, %v902
      %s911 = scalar_lea.vmem %s3, 7
      %v912 = vld [vmem:[%s911] ss:$8 sm:$0xf]
      %v914 = vperm.slane %v912, 0
      %v915 = vperm.slane %v912, 1
      %v916 = vperm.slane %v912, 2
      %v917 = vperm.slane %v912, 3
      %v922 = vmul.f32 %v844, %v914
      %v923 = vmul.f32 %v845, %v915
      %v924 = vmul.f32 %v846, %v916
      %v925 = vmul.f32 %v847, %v917
      %v926 = vmul.f32 %v848, %v914
      %v927 = vmul.f32 %v849, %v915
      %v928 = vmul.f32 %v850, %v916
      %v929 = vmul.f32 %v851, %v917
      %v930 = vadd.f32 %v903, %v922
      %v931 = vadd.f32 %v904, %v923
      %v932 = vadd.f32 %v905, %v924
      %v933 = vadd.f32 %v906, %v925
      %v934 = vadd.f32 %v907, %v926
      %v935 = vadd.f32 %v908, %v927
      %v936 = vadd.f32 %v909, %v928
      %v937 = vadd.f32 %v910, %v929
      %938 = vrot.lane.b32.xlu0 %v844, 96
      %v939 = vpop.permute.xlu0 %938
      %940 = vrot.lane.b32.xlu0 %v848, 96
      %v941 = vpop.permute.xlu0 %940
      %942 = vrot.lane.b32.xlu0 %v845, 96
      %v943 = vpop.permute.xlu0 %942
      %944 = vrot.lane.b32.xlu0 %v849, 96
      %v945 = vpop.permute.xlu0 %944
      %946 = vrot.lane.b32.xlu0 %v846, 96
      %v947 = vpop.permute.xlu0 %946
      %948 = vrot.lane.b32.xlu0 %v850, 96
      %v949 = vpop.permute.xlu0 %948
      %950 = vrot.lane.b32.xlu0 %v847, 96
      %v951 = vpop.permute.xlu0 %950
      %952 = vrot.lane.b32.xlu0 %v851, 96
      %v953 = vpop.permute.xlu0 %952
      %v954 = vsel %vm618, %v947, %v951
      %v955 = vsel %vm618, %v949, %v953
      %v956 = vsel %vm618, %v943, %v947
      %v957 = vsel %vm618, %v945, %v949
      %v958 = vsel %vm618, %v939, %v943
      %v959 = vsel %vm618, %v941, %v945
      %v960 = vsel %vm618, %v951, %v939
      %v961 = vsel %vm618, %v953, %v941
      %v962 = vsel %vm635, %v958, 0.0
      %v963 = vsel %vm636, %v956, 0.0
      %v964 = vsel %vm637, %v954, 0.0
      %v965 = vsel %vm638, %v960, 0.0
      %v966 = vsel %vm635, %v959, 0.0
      %v967 = vsel %vm636, %v957, 0.0
      %v968 = vsel %vm637, %v955, 0.0
      %v969 = vsel %vm638, %v961, 0.0
      %s970 = scalar_lea.vmem %s3, 32
      %v971 = vld [vmem:[%s970] ss:$8 sm:$0xf]
      %v973 = vperm.slane %v971, 0
      %v974 = vperm.slane %v971, 1
      %v975 = vperm.slane %v971, 2
      %v976 = vperm.slane %v971, 3
      %v981 = vmul.f32 %v962, %v973
      %v982 = vmul.f32 %v963, %v974
      %v983 = vmul.f32 %v964, %v975
      %v984 = vmul.f32 %v965, %v976
      %v985 = vmul.f32 %v966, %v973
      %v986 = vmul.f32 %v967, %v974
      %v987 = vmul.f32 %v968, %v975
      %v988 = vmul.f32 %v969, %v976
      %v989 = vadd.f32 %v930, %v981
      %v990 = vadd.f32 %v931, %v982
      %v991 = vadd.f32 %v932, %v983
      %v992 = vadd.f32 %v933, %v984
      %v993 = vadd.f32 %v934, %v985
      %v994 = vadd.f32 %v935, %v986
      %v995 = vadd.f32 %v936, %v987
      %v996 = vadd.f32 %v937, %v988
      %v997 = vld [vmem:[%s4] sm:$0xf]
      %v999 = vperm.slane %v997, 0
      %v1000 = vperm.slane %v997, 1
      %v1001 = vperm.slane %v997, 2
      %v1002 = vperm.slane %v997, 3
      %v1007 = vadd.f32 %v989, %v999
      %v1008 = vadd.f32 %v990, %v1000
      %v1009 = vadd.f32 %v991, %v1001
      %v1010 = vadd.f32 %v992, %v1002
      %v1011 = vadd.f32 %v993, %v999
      %v1012 = vadd.f32 %v994, %v1000
      %v1013 = vadd.f32 %v995, %v1001
      %v1014 = vadd.f32 %v996, %v1002
      %v1015 = vmax.f32 %v1007, 0.0
      %v1016 = vmax.f32 %v1008, 0.0
      %v1017 = vmax.f32 %v1009, 0.0
      %v1018 = vmax.f32 %v1010, 0.0
      %v1019 = vmax.f32 %v1011, 0.0
      %v1020 = vmax.f32 %v1012, 0.0
      %v1021 = vmax.f32 %v1013, 0.0
      %v1022 = vmax.f32 %v1014, 0.0
      %v1023 = vmin.f32 %v1015, 6.0
      %v1024 = vmin.f32 %v1016, 6.0
      %v1025 = vmin.f32 %v1017, 6.0
      %v1026 = vmin.f32 %v1018, 6.0
      %v1027 = vmin.f32 %v1019, 6.0
      %v1028 = vmin.f32 %v1020, 6.0
      %v1029 = vmin.f32 %v1021, 6.0
      %v1030 = vmin.f32 %v1022, 6.0
      %v1031 = vld [vmem:[%s5] sm:$0xff]
      %v1032 = vld [vmem:[%s5 + $0x8] sm:$0xff]
      %v1033 = vld [vmem:[%s5 + $0x10] sm:$0xff]
      %v1034 = vld [vmem:[%s5 + $0x18] sm:$0xff]
      %v1035 = vld [vmem:[%s5 + $0x20] sm:$0xff]
      %v1036 = vld [vmem:[%s5 + $0x28] sm:$0xff]
      %v1037 = vld [vmem:[%s5 + $0x30] sm:$0xff]
      %v1038 = vld [vmem:[%s5 + $0x38] sm:$0xff]
      %v1039 = vld [vmem:[%s5 + $0x40] sm:$0xff]
      %v1040 = vld [vmem:[%s5 + $0x48] sm:$0xff]
      %v1041 = vld [vmem:[%s5 + $0x50] sm:$0xff]
      %v1042 = vld [vmem:[%s5 + $0x58] sm:$0xff]
      %v1043 = vld [vmem:[%s5 + $0x60] sm:$0xff]
      %v1044 = vld [vmem:[%s5 + $0x68] sm:$0xff]
      %v1045 = vld [vmem:[%s5 + $0x70] sm:$0xff]
      %v1046 = vld [vmem:[%s5 + $0x78] sm:$0xff]
      %v1047 = vld [vmem:[%s5 + $0x80] sm:$0xff]
      %v1048 = vld [vmem:[%s5 + $0x88] sm:$0xff]
      %v1049 = vld [vmem:[%s5 + $0x90] sm:$0xff]
      %v1050 = vld [vmem:[%s5 + $0x98] sm:$0xff]
      %v1051 = vld [vmem:[%s5 + $0xa0] sm:$0xff]
      %v1052 = vld [vmem:[%s5 + $0xa8] sm:$0xff]
      %v1053 = vld [vmem:[%s5 + $0xb0] sm:$0xff]
      %v1054 = vld [vmem:[%s5 + $0xb8] sm:$0xff]
      %v1055 = vld [vmem:[%s5 + $0xc0] sm:$0xff]
      %v1056 = vld [vmem:[%s5 + $0xc8] sm:$0xff]
      %v1057 = vld [vmem:[%s5 + $0xd0] sm:$0xff]
      %v1058 = vld [vmem:[%s5 + $0xd8] sm:$0xff]
      %v1059 = vld [vmem:[%s5 + $0xe0] sm:$0xff]
      %v1060 = vld [vmem:[%s5 + $0xe8] sm:$0xff]
      %v1061 = vld [vmem:[%s5 + $0xf0] sm:$0xff]
      %v1062 = vld [vmem:[%s5 + $0xf8] sm:$0xff]
      %v1063 = vld [vmem:[%s5 + $0x100] sm:$0xff]
      %v1064 = vld [vmem:[%s5 + $0x108] sm:$0xff]
      %v1065 = vld [vmem:[%s5 + $0x110] sm:$0xff]
      %v1066 = vld [vmem:[%s5 + $0x118] sm:$0xff]
      %v1067 = vld [vmem:[%s5 + $0x120] sm:$0xff]
      %v1068 = vld [vmem:[%s5 + $0x128] sm:$0xff]
      %v1069 = vld [vmem:[%s5 + $0x130] sm:$0xff]
      %v1070 = vld [vmem:[%s5 + $0x138] sm:$0xff]
      %v1071 = vld [vmem:[%s5 + $0x140] sm:$0xff]
      %v1072 = vld [vmem:[%s5 + $0x148] sm:$0xff]
      %v1073 = vld [vmem:[%s5 + $0x150] sm:$0xff]
      %v1074 = vld [vmem:[%s5 + $0x158] sm:$0xff]
      %v1075 = vld [vmem:[%s5 + $0x160] sm:$0xff]
      %v1076 = vld [vmem:[%s5 + $0x168] sm:$0xff]
      %v1077 = vld [vmem:[%s5 + $0x170] sm:$0xff]
      %v1078 = vld [vmem:[%s5 + $0x178] sm:$0xff]
      %v1079 = vld [vmem:[%s5 + $0x180] sm:$0xff]
      %v1080 = vld [vmem:[%s5 + $0x188] sm:$0xff]
      %v1081 = vld [vmem:[%s5 + $0x190] sm:$0xff]
      %v1082 = vld [vmem:[%s5 + $0x198] sm:$0xff]
      %v1083 = vld [vmem:[%s5 + $0x1a0] sm:$0xff]
      %v1084 = vld [vmem:[%s5 + $0x1a8] sm:$0xff]
      %v1085 = vld [vmem:[%s5 + $0x1b0] sm:$0xff]
      %v1086 = vld [vmem:[%s5 + $0x1b8] sm:$0xff]
      %v1087 = vld [vmem:[%s5 + $0x1c0] sm:$0xff]
      %v1088 = vld [vmem:[%s5 + $0x1c8] sm:$0xff]
      %v1089 = vld [vmem:[%s5 + $0x1d0] sm:$0xff]
      %v1090 = vld [vmem:[%s5 + $0x1d8] sm:$0xff]
      %v1091 = vld [vmem:[%s5 + $0x1e0] sm:$0xff]
      %v1092 = vld [vmem:[%s5 + $0x1e8] sm:$0xff]
      %v1093 = vld [vmem:[%s5 + $0x1f0] sm:$0xff]
      %v1094 = vld [vmem:[%s5 + $0x1f8] sm:$0xff]
      %v1095 = vld [vmem:[%s6] sm:$0x1]
      %v1097 = vperm.slane %v1095, 0
      %1099 = vmatpush.msra.mxu0 %v1046
      %1100 = vmatpush.msra.mxu0 %v1045
      %1101 = vmatpush.msra.mxu0 %v1044
      %1102 = vmatpush.msra.mxu0 %v1043
      %1103 = vmatpush.msra.mxu0 %v1042
      %1104 = vmatpush.msra.mxu0 %v1041
      %1105 = vmatpush.msra.mxu0 %v1040
      %1106 = vmatpush.msra.mxu0 %v1039
      %1107 = vmatpush.msra.mxu0 %v1038
      %1108 = vmatpush.msra.mxu0 %v1037
      %1109 = vmatpush.msra.mxu0 %v1036
      %1110 = vmatpush.msra.mxu0 %v1035
      %1111 = vmatpush.msra.mxu0 %v1034
      %1112 = vmatpush.msra.mxu0 %v1033
      %1113 = vmatpush.msra.mxu0 %v1032
      %1114 = vmatpush.msra.mxu0 %v1031
      %1115 = vmatmul.f32.gmra.mxu0 %v1023
      %v1116 = vpop.f32.mrf.mxu0
      %v1117 = vadd.f32 %v1097, %v1116
      %1118 = vmatmul.f32.gmra.mxu0 %v1027
      %v1119 = vpop.f32.mrf.mxu0
      %v1120 = vadd.f32 %v1097, %v1119
      %1121 = vdwg.mxu0
      %1122 = vmatpush.msra.mxu0 %v1062
      %1123 = vmatpush.msra.mxu0 %v1061
      %1124 = vmatpush.msra.mxu0 %v1060
      %1125 = vmatpush.msra.mxu0 %v1059
      %1126 = vmatpush.msra.mxu0 %v1058
      %1127 = vmatpush.msra.mxu0 %v1057
      %1128 = vmatpush.msra.mxu0 %v1056
      %1129 = vmatpush.msra.mxu0 %v1055
      %1130 = vmatpush.msra.mxu0 %v1054
      %1131 = vmatpush.msra.mxu0 %v1053
      %1132 = vmatpush.msra.mxu0 %v1052
      %1133 = vmatpush.msra.mxu0 %v1051
      %1134 = vmatpush.msra.mxu0 %v1050
      %1135 = vmatpush.msra.mxu0 %v1049
      %1136 = vmatpush.msra.mxu0 %v1048
      %1137 = vmatpush.msra.mxu0 %v1047
      %1138 = vmatmul.f32.gmra.mxu0 %v1024
      %v1139 = vpop.f32.mrf.mxu0
      %v1140 = vadd.f32 %v1117, %v1139
      %1141 = vmatmul.f32.gmra.mxu0 %v1028
      %v1142 = vpop.f32.mrf.mxu0
      %v1143 = vadd.f32 %v1120, %v1142
      %1144 = vdwg.mxu0
      %1145 = vmatpush.msra.mxu0 %v1078
      %1146 = vmatpush.msra.mxu0 %v1077
      %1147 = vmatpush.msra.mxu0 %v1076
      %1148 = vmatpush.msra.mxu0 %v1075
      %1149 = vmatpush.msra.mxu0 %v1074
      %1150 = vmatpush.msra.mxu0 %v1073
      %1151 = vmatpush.msra.mxu0 %v1072
      %1152 = vmatpush.msra.mxu0 %v1071
      %1153 = vmatpush.msra.mxu0 %v1070
      %1154 = vmatpush.msra.mxu0 %v1069
      %1155 = vmatpush.msra.mxu0 %v1068
      %1156 = vmatpush.msra.mxu0 %v1067
      %1157 = vmatpush.msra.mxu0 %v1066
      %1158 = vmatpush.msra.mxu0 %v1065
      %1159 = vmatpush.msra.mxu0 %v1064
      %1160 = vmatpush.msra.mxu0 %v1063
      %1161 = vmatmul.f32.gmra.mxu0 %v1025
      %v1162 = vpop.f32.mrf.mxu0
      %v1163 = vadd.f32 %v1140, %v1162
      %1164 = vmatmul.f32.gmra.mxu0 %v1029
      %v1165 = vpop.f32.mrf.mxu0
      %v1166 = vadd.f32 %v1143, %v1165
      %1167 = vdwg.mxu0
      %1168 = vmatpush.msra.mxu0 %v1094
      %1169 = vmatpush.msra.mxu0 %v1093
      %1170 = vmatpush.msra.mxu0 %v1092
      %1171 = vmatpush.msra.mxu0 %v1091
      %1172 = vmatpush.msra.mxu0 %v1090
      %1173 = vmatpush.msra.mxu0 %v1089
      %1174 = vmatpush.msra.mxu0 %v1088
      %1175 = vmatpush.msra.mxu0 %v1087
      %1176 = vmatpush.msra.mxu0 %v1086
      %1177 = vmatpush.msra.mxu0 %v1085
      %1178 = vmatpush.msra.mxu0 %v1084
      %1179 = vmatpush.msra.mxu0 %v1083
      %1180 = vmatpush.msra.mxu0 %v1082
      %1181 = vmatpush.msra.mxu0 %v1081
      %1182 = vmatpush.msra.mxu0 %v1080
      %1183 = vmatpush.msra.mxu0 %v1079
      %1184 = vmatmul.f32.gmra.mxu0 %v1026
      %v1185 = vpop.f32.mrf.mxu0
      %v1186 = vadd.f32 %v1163, %v1185
      %1187 = vmatmul.f32.gmra.mxu0 %v1030
      %v1188 = vpop.f32.mrf.mxu0
      %v1189 = vadd.f32 %v1166, %v1188
      %1190 = vdwg.mxu0
      %v1191 = vadd.f32 %v1186, %v279
      %v1192 = vadd.f32 %v1189, %v280
      %1193 = vst [vmem:[%s278] sm:$0xff] %v1191
      %1194 = vst [vmem:[%s278 + $0x8] sm:$0xff] %v1192
      %p1195 = scmp.lt.s32.totalorder %s18, 1
      %s1196 = scalar_select %p1195, %s18, 1
      %s1197 = smul.addr %s1196, 2
      %s1198 = smul.addr %s1197, 8
      %s1199 = scalar_lea.vmem %s7, %s1198
      // Predicated region
      $region49: #{inverted_residual_pallas.1} parent=47 // pred_check
        %p1200 = pneg %p188
      $region50: #{inverted_residual_pallas.1} parent=47 // pred_check_branch
        %1202 = sbr.rel (%p1200) target = $region52
      $region51: #{inverted_residual_pallas.1} parent=47 // pred_region
        _
      $region52: #{inverted_residual_pallas.1} parent=47 // pred_fallthru
        _
    $region48: #{inverted_residual_pallas.1} parent=5 // pred_fallthru
      _
    %p1203 = scmp.le.s32.totalorder 2, %s13
    // Predicated region
    $region53: #{inverted_residual_pallas.1} parent=5 // pred_check
      %p1204 = pneg %p1203
    $region54: #{inverted_residual_pallas.1} parent=5 // pred_check_branch
      %1206 = sbr.rel (%p1204) target = $region56
    $region55: #{inverted_residual_pallas.1} parent=5 // pred_region
      %s1207 = ssub.s32 %s13, 2
      // Predicated region
      $region57: #{inverted_residual_pallas.1} parent=55 // pred_check
        %p1208 = pneg %p194
      $region58: #{inverted_residual_pallas.1} parent=55 // pred_check_branch
        %1210 = sbr.rel (%p1208) target = $region60
      $region59: #{inverted_residual_pallas.1} parent=55 // pred_region
        %p1211 = scmp.lt.s32.totalorder %s19, 1
        %s1212 = scalar_select %p1211, %s19, 1
        %s1213 = smul.addr %s1212, 2
        %s1214 = smul.addr %s1213, 8
        %s1215 = scalar_lea.vmem %s7, %s1214
      $region60: #{inverted_residual_pallas.1} parent=55 // pred_fallthru
        _
    $region56: #{inverted_residual_pallas.1} parent=5 // pred_fallthru
      _
  $region6: #{inverted_residual_pallas.1} parent=0 // loop_footer
    %s17 = sadd.s32 1, %s13
  $region7: #{inverted_residual_pallas.1} parent=0 // loop_footer_branch
    %12 = sbr.rel target = $region3
  $region8: #{inverted_residual_pallas.1} parent=0 // loop_exit
    _

</llo_original>
